<compile_context>
chip_gen: v7x
topology: tpu7x:2x2x1
jax: 0.10.0
libtpu: 0.0.40
codegen_flags: <defaults>
</compile_context>

<pallas_src>
import math

import jax
import jax.numpy as jnp
import numpy as np
from jax import lax
from jax.experimental import pallas as pl
from jax.experimental.pallas import tpu as pltpu

WIDTH = 36  # module default
_INV_SQRT2 = 1.0 / math.sqrt(2.0)


def _round_up(x, m):
    return ((x + m - 1) // m) * m


def _iphi_kernel(x_ref, bexp_t_ref, wall_ref, w4_t_ref, b4_t_ref, o_ref, act_ref):
    """Feature-major body: features on sublanes, rows (M) on lanes.

    x_ref    : (8, tm)       rows 0-2 = x^T, row 3 = 1.0 (bias carrier), rows 4-7 = 0
    bexp_t   : (KP, 8)       frequency expansion (rows >= width and cols >= 3 are zero)
    wall     : (4w, 8+2*KP)  fused [fc0 | bias | 0 | sin | 0 | cos | 0] weight
    w4_t     : (3, 4w),  b4_t : (3, 1)
    o_ref    : (3, tm)
    act_ref  : (8+2*KP, tm)  VMEM scratch, fully rewritten every grid step
    """
    kp = bexp_t_ref.shape[0]

    x8 = x_ref[...]                                                       # (8, tm)

    # Frequency expansion: xb[j, m] = B[j % k] * x[j // k, m]  (tiny-K MXU matmul;
    # MXU has plenty of slack here).  Rows >= width are exactly 0.
    xb = jnp.dot(bexp_t_ref[...], x8, preferred_element_type=jnp.float32)  # (KP, tm)

    # Fused activation [x8 | sin(xb) | cos(xb)] — all stores at 8-aligned offsets.
    act_ref[0:8, :] = x8
    act_ref[8:8 + kp, :] = jnp.sin(xb)
    act_ref[8 + kp:8 + 2 * kp, :] = jnp.cos(xb)
    # (cos(0)=1 on the pad rows is harmless: the matching weight columns are zero.)

    # Single matmul replaces fc0 + concat + fc_no_code + fc3 + all pre-GELU biases.
    h = jnp.dot(wall_ref[...], act_ref[...], preferred_element_type=jnp.float32)  # (4w, tm)

    # exact GELU (matches torch.nn.functional.gelu default, erf form)
    h = 0.5 * h * (1.0 + lax.erf(h * _INV_SQRT2))

    # fc4
    h3 = jnp.dot(w4_t_ref[...], h, preferred_element_type=jnp.float32) + b4_t_ref[...]

    # out = x + x * xd
    x3 = x8[0:3, :]
    o_ref[...] = x3 + x3 * h3


def _fold_params(params):
    """Fold fc_no_code∘fc3, fc0 and all pre-GELU biases into one fused weight.

    Exact algebra (only reassociates f32 sums).  Activation row layout seen by
    the kernel (feature-major):
        rows 0:3            x
        row  3              1.0   (carries the folded pre-GELU bias)
        rows 4:8            0
        rows 8:8+KP         sin(xb)   (rows >= width are sin(0)=0)
        rows 8+KP:8+2*KP    cos(xb)   (rows >= width are cos(0)=1 -> zero weight cols)
    """
    (w0, b0, wnc, bnc, w3, b3, w4, b4) = params
    width = w0.shape[1]
    k = width // 3
    fw = 4 * width
    kp = _round_up(width, 8)

    # fc_no_code then fc3 (no nonlinearity between):  W' = Wnc @ W3,  b' = bnc @ W3 + b3
    wp = wnc @ w3                        # (3*width, 4*width)
    bp = bnc @ w3 + b3                   # (1, 4*width)

    wx_t = (w0 @ wp[:width]).T           # (4w, 3)     fc0 folded into the x block
    ball_t = (b0 @ wp[:width] + bp).T    # (4w, 1)     all pre-GELU biases
    wsin_t = wp[width:2 * width].T       # (4w, width)
    wcos_t = wp[2 * width:3 * width].T   # (4w, width)

    zpad = jnp.zeros((fw, kp - width), jnp.float32)
    wall = jnp.concatenate(
        [wx_t, ball_t, jnp.zeros((fw, 4), jnp.float32),   # x block + bias carrier + pad
         wsin_t, zpad,                                     # sin block + pad
         wcos_t, zpad],                                    # cos block + pad
        axis=1).astype(jnp.float32)                        # (4w, 8 + 2*kp)

    # Frequency expansion reproducing (B * x.view(b,n,3,1)).view(b,n,width),
    # padded to KP rows / 8 cols (extra rows/cols exactly zero).
    bvals = np.pi * (2.0 ** np.arange(k, dtype=np.float64))
    bexp = np.zeros((kp, 8), np.float32)
    for dd in range(3):
        bexp[dd * k:(dd + 1) * k, dd] = bvals
    bexp_t = jnp.asarray(bexp)

    return bexp_t, wall, w4.T.astype(jnp.float32), b4.T.astype(jnp.float32)


def iphi_forward(x, params, *, tm=8192, vmem_limit_bytes=48 * 1024 * 1024):
    """x: (b, n, 3) float32 -> (b, n, 3) float32."""
    b, n, d = x.shape
    assert d == 3
    M = b * n

    bexp_t, wall, w4_t, b4_t = _fold_params(params)
    kp = bexp_t.shape[0]
    act_rows = 8 + 2 * kp

    # Row tile: multiple of 128, <= requested tm, and >= 2 grid steps whenever the
    # 128-padded problem allows it (so v7x's two TensorCores both get work).
    nblk = _round_up(M, 128) // 128
    tblk = min(max(1, int(tm) // 128), nblk)
    if nblk >= 2:
        tblk = min(tblk, (nblk + 1) // 2)
    tm_eff = 128 * tblk
    Mp = _round_up(M, tm_eff)

    # Feature-major augmented input: rows 0-2 = x^T, row 3 = 1 (bias), rows 4-7 = 0.
    x2 = x.reshape(M, d).astype(jnp.float32)
    if Mp != M:
        # zero rows -> zero outputs (out = x + x*h with x = 0), sliced off below
        x2 = jnp.pad(x2, ((0, Mp - M), (0, 0)))
    x_aug = jnp.concatenate(
        [x2, jnp.ones((Mp, 1), jnp.float32), jnp.zeros((Mp, 4), jnp.float32)], axis=1)
    x_fm = x_aug.T                                                         # (8, Mp)

    def full(a):
        nd = a.ndim
        return pl.BlockSpec(a.shape, lambda i, _nd=nd: (0,) * _nd)

    out_fm = pl.pallas_call(
        _iphi_kernel,
        out_shape=jax.ShapeDtypeStruct((d, Mp), jnp.float32),
        grid_spec=pltpu.PrefetchScalarGridSpec(
            num_scalar_prefetch=0,
            grid=(Mp // tm_eff,),
            in_specs=[
                pl.BlockSpec((8, tm_eff), lambda i: (0, i)),   # augmented x (feature-major)
                full(bexp_t),                                   # (kp, 8)
                full(wall),                                     # (4w, 8+2kp)
                full(w4_t),                                     # (3, 4w)
                full(b4_t),                                     # (3, 1)
            ],
            out_specs=pl.BlockSpec((d, tm_eff), lambda i: (0, i)),
            scratch_shapes=[pltpu.VMEM((act_rows, tm_eff), jnp.float32)],
        ),
        compiler_params=pltpu.CompilerParams(
            dimension_semantics=("parallel",),
            vmem_limit_bytes=int(vmem_limit_bytes),
        ),
    )(x_fm, bexp_t, wall, w4_t, b4_t)

    return out_fm.T[:M].reshape(b, n, d)


def make_params(key, width=WIDTH):
    """Deterministic synthetic parameters (PyTorch Linear shapes, stored as (in, out))."""
    d = 3
    ks = jax.random.split(key, 4)

    def lin(k, fan_in, fan_out):
        kw, kb = jax.random.split(k)
        bound = 1.0 / math.sqrt(fan_in)
        w = jax.random.uniform(kw, (fan_in, fan_out), jnp.float32, -bound, bound)
        b = jax.random.uniform(kb, (1, fan_out), jnp.float32, -bound, bound)
        return w, b

    w0, b0 = lin(ks[0], d, width)                 # fc0: Linear(3, width)
    wnc, bnc = lin(ks[1], 3 * width, 4 * width)   # fc_no_code
    w3, b3 = lin(ks[2], 4 * width, 4 * width)     # fc3
    w4, b4 = lin(ks[3], 4 * width, d)             # fc4
    # fc1, fc2, fc_code, center exist in __init__ but are unused in forward().
    return (w0, b0, wnc, bnc, w3, b3, w4, b4)


def iphi_reference(x, params):
    """Plain-JAX reference following the *original* (unfolded) module exactly."""
    (w0, b0, wnc, bnc, w3, b3, w4, b4) = params
    b, n, d = x.shape
    width = w0.shape[1]
    k = width // 3
    B = jnp.pi * (2.0 ** jnp.arange(k, dtype=jnp.float32)).reshape(1, 1, 1, k)
    x_sin = jnp.sin(B * x[..., None]).reshape(b, n, d * k)
    x_cos = jnp.cos(B * x[..., None]).reshape(b, n, d * k)
    h0 = x @ w0 + b0
    h = jnp.concatenate([h0, x_sin, x_cos], axis=-1)
    h = h @ wnc + bnc
    h = h @ w3 + b3
    h = jax.nn.gelu(h, approximate=False)
    h = h @ w4 + b4
    return x + x * h


if __name__ == "__main__":
    key = jax.random.PRNGKey(0)
    kx1, kx2, kx3, kp_ = jax.random.split(key, 4)
    params = make_params(kp_, WIDTH)

    # Small shape, M divisible by 128 (single grid step).
    b, n, d = 2, 64, 3                      # M = 128
    x = jax.random.uniform(kx1, (b, n, d), jnp.float32, -1.0, 1.0)
    out = jax.block_until_ready(iphi_forward(x, params))
    ref = iphi_reference(x, params)
    np.testing.assert_allclose(np.asarray(out), np.asarray(ref), rtol=1e-4, atol=1e-4)

    # M NOT divisible by the tile: exercises padding + the >=2-grid-step rule.
    b2, n2 = 2, 100                         # M = 200 -> tm=128, Mp=256, grid=2
    x2 = jax.random.uniform(kx2, (b2, n2, d), jnp.float32, -1.0, 1.0)
    out2 = jax.block_until_ready(iphi_forward(x2, params))
    ref2 = iphi_reference(x2, params)
    np.testing.assert_allclose(np.asarray(out2), np.asarray(ref2), rtol=1e-4, atol=1e-4)

    # Larger M: multi-block tile, padding, still >= 2 grid steps.
    b3, n3 = 3, 700                         # M = 2100 -> tm=1152, Mp=2304, grid=2
    x3 = jax.random.uniform(kx3, (b3, n3, d), jnp.float32, -1.0, 1.0)
    out3 = jax.block_until_ready(iphi_forward(x3, params))
    ref3 = iphi_reference(x3, params)
    np.testing.assert_allclose(np.asarray(out3), np.asarray(ref3), rtol=1e-4, atol=1e-4)

    print("KERNEL_OK")
</pallas_src>

<mosaic_0001>
module attributes {stable_mosaic.version = 11 : i64} {
  func.func @_iphi_kernel(%arg0: i32, %arg1: memref<8x128xf32, #tpu.memory_space<vmem>>, %arg2: memref<40x8xf32, #tpu.memory_space<vmem>>, %arg3: memref<144x88xf32, #tpu.memory_space<vmem>>, %arg4: memref<3x144xf32, #tpu.memory_space<vmem>>, %arg5: memref<3x1xf32, #tpu.memory_space<vmem>>, %arg6: memref<3x128xf32, #tpu.memory_space<vmem>>, %arg7: memref<88x128xf32, #tpu.memory_space<vmem>>) attributes {dimension_semantics = [#tpu.dimension_semantics<parallel>], iteration_bounds = array<i64: 1>, scalar_prefetch = 0 : i64, scratch_operands = 1 : i64, tpu.core_type = #tpu.core_type<tc>, window_params = [{transform_indices = @transform_0, window_bounds = array<i64: 8, 128>}, {pipeline_mode = #tpu.pipeline_mode<synchronous>, transform_indices = @transform_1, window_bounds = array<i64: 40, 8>}, {pipeline_mode = #tpu.pipeline_mode<synchronous>, transform_indices = @transform_2, window_bounds = array<i64: 144, 88>}, {pipeline_mode = #tpu.pipeline_mode<synchronous>, transform_indices = @transform_3, window_bounds = array<i64: 3, 144>}, {pipeline_mode = #tpu.pipeline_mode<synchronous>, transform_indices = @transform_4, window_bounds = array<i64: 3, 1>}, {transform_indices = @transform_5, window_bounds = array<i64: 3, 128>}]} {
    %c0 = arith.constant 0 : index
    %c0_0 = arith.constant 0 : index
    %0 = vector.load %arg1[%c0, %c0_0] : memref<8x128xf32, #tpu.memory_space<vmem>>, vector<8x128xf32>
    %c0_1 = arith.constant 0 : index
    %c0_2 = arith.constant 0 : index
    %1 = vector.load %arg2[%c0_1, %c0_2] : memref<40x8xf32, #tpu.memory_space<vmem>>, vector<40x8xf32>
    %cst = arith.constant dense<0.000000e+00> : vector<40x128xf32>
    %2 = tpu.matmul %1, %0, %cst {dimension_numbers = #tpu.dot_dimension_numbers<[1], [0], [0], [1], [0, 0, 1, 1], [], []>} : vector<40x8xf32>, vector<8x128xf32>, vector<40x128xf32> -> vector<40x128xf32>
    %c0_3 = arith.constant 0 : index
    %c0_4 = arith.constant 0 : index
    %3 = vector.load %arg7[%c0_3, %c0_4] : memref<88x128xf32, #tpu.memory_space<vmem>>, vector<8x128xf32>
    tpu.vector_store %arg7[%c0_3, %c0_4], %0 {strides = array<i32>} : memref<88x128xf32, #tpu.memory_space<vmem>>, vector<8x128xf32>,
    %4 = math.sin %2 : vector<40x128xf32>
    %c8 = arith.constant 8 : index
    %c0_5 = arith.constant 0 : index
    %5 = vector.load %arg7[%c8, %c0_5] : memref<88x128xf32, #tpu.memory_space<vmem>>, vector<40x128xf32>
    tpu.vector_store %arg7[%c8, %c0_5], %4 {strides = array<i32>} : memref<88x128xf32, #tpu.memory_space<vmem>>, vector<40x128xf32>,
    %6 = math.cos %2 : vector<40x128xf32>
    %c48 = arith.constant 48 : index
    %c0_6 = arith.constant 0 : index
    %7 = vector.load %arg7[%c48, %c0_6] : memref<88x128xf32, #tpu.memory_space<vmem>>, vector<40x128xf32>
    tpu.vector_store %arg7[%c48, %c0_6], %6 {strides = array<i32>} : memref<88x128xf32, #tpu.memory_space<vmem>>, vector<40x128xf32>,
    %c0_7 = arith.constant 0 : index
    %c0_8 = arith.constant 0 : index
    %8 = vector.load %arg3[%c0_7, %c0_8] : memref<144x88xf32, #tpu.memory_space<vmem>>, vector<144x88xf32>
    %c0_9 = arith.constant 0 : index
    %c0_10 = arith.constant 0 : index
    %9 = vector.load %arg7[%c0_9, %c0_10] : memref<88x128xf32, #tpu.memory_space<vmem>>, vector<88x128xf32>
    %cst_11 = arith.constant dense<0.000000e+00> : vector<144x128xf32>
    %10 = tpu.matmul %8, %9, %cst_11 {dimension_numbers = #tpu.dot_dimension_numbers<[1], [0], [0], [1], [0, 0, 1, 1], [], []>} : vector<144x88xf32>, vector<88x128xf32>, vector<144x128xf32> -> vector<144x128xf32>
    %cst_12 = arith.constant 5.000000e-01 : f32
    %11 = vector.broadcast %cst_12 : f32 to vector<144x128xf32>
    %12 = arith.mulf %11, %10 : vector<144x128xf32>
    %cst_13 = arith.constant 0.707106769 : f32
    %13 = vector.broadcast %cst_13 : f32 to vector<144x128xf32>
    %14 = arith.mulf %10, %13 : vector<144x128xf32>
    %15 = math.erf %14 : vector<144x128xf32>
    %cst_14 = arith.constant 1.000000e+00 : f32
    %16 = vector.broadcast %cst_14 : f32 to vector<144x128xf32>
    %17 = arith.addf %16, %15 : vector<144x128xf32>
    %18 = arith.mulf %12, %17 : vector<144x128xf32>
    %c0_15 = arith.constant 0 : index
    %c0_16 = arith.constant 0 : index
    %19 = vector.load %arg4[%c0_15, %c0_16] : memref<3x144xf32, #tpu.memory_space<vmem>>, vector<3x144xf32>
    %cst_17 = arith.constant dense<0.000000e+00> : vector<3x128xf32>
    %20 = tpu.matmul %19, %18, %cst_17 {dimension_numbers = #tpu.dot_dimension_numbers<[1], [0], [0], [1], [0, 0, 1, 1], [], []>} : vector<3x144xf32>, vector<144x128xf32>, vector<3x128xf32> -> vector<3x128xf32>
    %c0_18 = arith.constant 0 : index
    %c0_19 = arith.constant 0 : index
    %21 = vector.load %arg5[%c0_18, %c0_19] : memref<3x1xf32, #tpu.memory_space<vmem>>, vector<3x1xf32>
    %22 = vector.broadcast %21 : vector<3x1xf32> to vector<3x128xf32>
    %23 = arith.addf %20, %22 : vector<3x128xf32>
    %24 = vector.extract_strided_slice %0 {offsets = [0, 0], sizes = [3, 128], strides = [1, 1]} : vector<8x128xf32> to vector<3x128xf32>
    %25 = arith.mulf %24, %23 : vector<3x128xf32>
    %26 = arith.addf %24, %25 : vector<3x128xf32>
    %c0_20 = arith.constant 0 : index
    %c0_21 = arith.constant 0 : index
    %27 = vector.load %arg6[%c0_20, %c0_21] : memref<3x128xf32, #tpu.memory_space<vmem>>, vector<3x128xf32>
    tpu.vector_store %arg6[%c0_20, %c0_21], %26 {strides = array<i32>} : memref<3x128xf32, #tpu.memory_space<vmem>>, vector<3x128xf32>,
    return
  }
  func.func @transform_0(%arg0: i32) -> (i32, i32) {
    %c0_i32 = arith.constant 0 : i32
    %c0_i32_0 = arith.constant 0 : i32
    return %c0_i32, %arg0 : i32, i32
  }
  func.func @transform_1(%arg0: i32) -> (i32, i32) {
    %c0_i32 = arith.constant 0 : i32
    %c0_i32_0 = arith.constant 0 : i32
    %c0_i32_1 = arith.constant 0 : i32
    return %c0_i32, %c0_i32_0 : i32, i32
  }
  func.func @transform_2(%arg0: i32) -> (i32, i32) {
    %c0_i32 = arith.constant 0 : i32
    %c0_i32_0 = arith.constant 0 : i32
    %c0_i32_1 = arith.constant 0 : i32
    return %c0_i32, %c0_i32_0 : i32, i32
  }
  func.func @transform_3(%arg0: i32) -> (i32, i32) {
    %c0_i32 = arith.constant 0 : i32
    %c0_i32_0 = arith.constant 0 : i32
    %c0_i32_1 = arith.constant 0 : i32
    return %c0_i32, %c0_i32_0 : i32, i32
  }
  func.func @transform_4(%arg0: i32) -> (i32, i32) {
    %c0_i32 = arith.constant 0 : i32
    %c0_i32_0 = arith.constant 0 : i32
    %c0_i32_1 = arith.constant 0 : i32
    return %c0_i32, %c0_i32_0 : i32, i32
  }
  func.func @transform_5(%arg0: i32) -> (i32, i32) {
    %c0_i32 = arith.constant 0 : i32
    %c0_i32_0 = arith.constant 0 : i32
    return %c0_i32, %arg0 : i32, i32
  }
}

</mosaic_0001>

<llo_original>
// kernel: tpu_custom_call.1
$region0: #{tpu_custom_call.1}
  #allocation0 [shape = 'u32[]', space=smem, size = 0x4, offset = 0x4, fixed_abs, tag = 'smem constant byte address 0x4 - core index']
  #allocation1 [shape = 'u32[144,128]{1,0:T(1,128)}', space=vmem, size = 0x12000, scoped, tag = 'internal scratch']
  #allocation2 [shape = 'f32[88,128]{1,0:T(8,128)}', space=vmem, size = 0xb000, scoped, tag = 'scratch operand']
  %s0 = inlined_call_operand.vmem [shape: f32[8,128], index: 0, kind: input, shape index: {}]
  %s1 = inlined_call_operand.vmem [shape: f32[40,8], index: 1, kind: input, shape index: {}]
  %s2 = inlined_call_operand.hbm [shape: f32[144,88], index: 2, kind: input, shape index: {}]
  %s3 = inlined_call_operand.vmem [shape: f32[3,144], index: 3, kind: input, shape index: {}]
  %s4 = inlined_call_operand.vmem [shape: f32[3,1], index: 4, kind: input, shape index: {}]
  %s5 = inlined_call_operand.hbm [shape: f32[3,128], index: 5, kind: output, shape index: {}]
  %s6 = sld [smem:[#allocation0]]
  $region34: #{tpu_custom_call.1} parent=0
    _
  %s8 = ssub.s32 1, %s6
  %s9 = scalar_select 0, %s8, %s6
  $region1: #{tpu_custom_call.1} parent=0
    #allocation3 [shape = 'u8[73728]{0}', space=vmem, size = 0x12000, scoped, tag = 'input window, operand 2, single buffered']
    #allocation4 [shape = 's32[1]{0}', space=sflag, size = 0x4, scoped, tag = 'scoped memory for tpu_custom_call.1']
    #allocation5 [shape = 's32[1]{0}', space=sflag, size = 0x4, scoped, tag = 'scoped memory for tpu_custom_call.1']
    #allocation6 [shape = 'u8[2048]{0}', space=vmem, size = 0x800, scoped, tag = 'output window, operand 0, single buffered']
    %10 = vsyncpa [#allocation4], 0
    %11 = vsyncpa [#allocation5], 0
    // Predicated region
    $region2: #{tpu_custom_call.1} parent=1 // pred_check
      _
    $region3: #{tpu_custom_call.1} parent=1 // pred_check_branch
      %13 = sbr.rel (0) target = $region5
    $region4: #{tpu_custom_call.1} parent=1 // pred_region
      _
    $region5: #{tpu_custom_call.1} parent=1 // pred_fallthru
      _
    // Predicated region
    $region6: #{tpu_custom_call.1} parent=1 // pred_check
      _
    $region7: #{tpu_custom_call.1} parent=1 // pred_check_branch
      %15 = sbr.rel (0) target = $region9
    $region8: #{tpu_custom_call.1} parent=1 // pred_region
      _
    $region9: #{tpu_custom_call.1} parent=1 // pred_fallthru
      _
    // Predicated region
    $region10: #{tpu_custom_call.1} parent=1 // pred_check
      _
    $region11: #{tpu_custom_call.1} parent=1 // pred_check_branch
      %17 = sbr.rel (0) target = $region13
    $region12: #{tpu_custom_call.1} parent=1 // pred_region
      %s19 = ssub.s32 2304, 2304
      %20 = vsyncadd [#allocation4], %s19
      %s21 = sshll.u32 [#allocation3], 4
      %s22 = int_to_ptr.vmem [resolvable:$true] %s21
      %27 = dma.hbm_to_vmem [thread:$0]  %s2, 2304, %s22, [#allocation4], 128, 128, 8
    $region13: #{tpu_custom_call.1} parent=1 // pred_fallthru
      _
    // Predicated region
    $region14: #{tpu_custom_call.1} parent=1 // pred_check
      _
    $region15: #{tpu_custom_call.1} parent=1 // pred_check_branch
      %29 = sbr.rel (0) target = $region17
    $region16: #{tpu_custom_call.1} parent=1 // pred_region
      _
    $region17: #{tpu_custom_call.1} parent=1 // pred_fallthru
      _
    // Predicated region
    $region18: #{tpu_custom_call.1} parent=1 // pred_check
      _
    $region19: #{tpu_custom_call.1} parent=1 // pred_check_branch
      %31 = sbr.rel (0) target = $region21
    $region20: #{tpu_custom_call.1} parent=1 // pred_region
      _
    $region21: #{tpu_custom_call.1} parent=1 // pred_fallthru
      _
    // Predicated region
    $region22: #{tpu_custom_call.1} parent=1 // pred_check
      _
    $region23: #{tpu_custom_call.1} parent=1 // pred_check_branch
      %33 = sbr.rel (0) target = $region25
    $region24: #{tpu_custom_call.1} parent=1 // pred_region
      %34 = dma.done [#allocation4], 2304
    $region25: #{tpu_custom_call.1} parent=1 // pred_fallthru
      _
    %v35 = vld [vmem:[%s0] sm:$0xff]
    %v36 = vld [vmem:[%s1] sm:$0xff]
    %v37 = vld [vmem:[%s1 + $0x8] sm:$0xff]
    %v38 = vld [vmem:[%s1 + $0x10] sm:$0xff]
    %v39 = vld [vmem:[%s1 + $0x18] sm:$0xff]
    %v40 = vld [vmem:[%s1 + $0x20] sm:$0xff]
    %vm41 = vcmask 64512
    %v43 = vsel %vm41, %v36, 0
    %v46 = vsel %vm41, %v37, 0
    %v49 = vsel %vm41, %v38, 0
    %v52 = vsel %vm41, %v39, 0
    %v55 = vsel %vm41, %v40, 0
    %57 = vmatprep.subr.mxu0 0.0
    %58 = vmatpush1.msra.mxu0 %v35
    %59 = vmatprep.subr.mxu0 0.0
    %60 = vmatpush1.msra.mxu0 0.0
    %61 = vmatprep.subr.mxu0 0.0
    %62 = vmatpush1.msra.mxu0 0.0
    %63 = vmatprep.subr.mxu0 0.0
    %64 = vmatpush1.msra.mxu0 0.0
    %65 = vmatprep.subr.mxu0 0.0
    %66 = vmatpush1.msra.mxu0 0.0
    %67 = vmatprep.subr.mxu0 0.0
    %68 = vmatpush1.msra.mxu0 0.0
    %69 = vmatprep.subr.mxu0 0.0
    %70 = vmatpush1.msra.mxu0 0.0
    %71 = vmatprep.subr.mxu0 0.0
    %72 = vmatpush1.msra.mxu0 0.0
    %73 = vmatprep.subr.mxu0 0.0
    %74 = vmatpush1.msra.mxu0 0.0
    %75 = vmatprep.subr.mxu0 0.0
    %76 = vmatpush1.msra.mxu0 0.0
    %77 = vmatprep.subr.mxu0 0.0
    %78 = vmatpush1.msra.mxu0 0.0
    %79 = vmatprep.subr.mxu0 0.0
    %80 = vmatpush1.msra.mxu0 0.0
    %81 = vmatprep.subr.mxu0 0.0
    %82 = vmatpush1.msra.mxu0 0.0
    %83 = vmatprep.subr.mxu0 0.0
    %84 = vmatpush1.msra.mxu0 0.0
    %85 = vmatprep.subr.mxu0 0.0
    %86 = vmatpush1.msra.mxu0 0.0
    %87 = vmatprep.subr.mxu0 0.0
    %88 = vmatpush1.msra.mxu0 0.0
    %89 = vmatprep.subr.mxu0 0.0
    %90 = vmatpush1.msra.mxu0 0.0
    %91 = vmatprep.subr.mxu0 0.0
    %92 = vmatpush1.msra.mxu0 0.0
    %93 = vmatprep.subr.mxu0 0.0
    %94 = vmatpush1.msra.mxu0 0.0
    %95 = vmatprep.subr.mxu0 0.0
    %96 = vmatpush1.msra.mxu0 0.0
    %97 = vmatprep.subr.mxu0 0.0
    %98 = vmatpush1.msra.mxu0 0.0
    %99 = vmatprep.subr.mxu0 0.0
    %100 = vmatpush1.msra.mxu0 0.0
    %101 = vmatprep.subr.mxu0 0.0
    %102 = vmatpush1.msra.mxu0 0.0
    %103 = vmatprep.subr.mxu0 0.0
    %104 = vmatpush1.msra.mxu0 0.0
    %105 = vmatprep.subr.mxu0 0.0
    %106 = vmatpush1.msra.mxu0 0.0
    %107 = vmatprep.subr.mxu0 0.0
    %108 = vmatpush1.msra.mxu0 0.0
    %109 = vmatprep.subr.mxu0 0.0
    %110 = vmatpush1.msra.mxu0 0.0
    %111 = vmatprep.subr.mxu0 0.0
    %112 = vmatpush1.msra.mxu0 0.0
    %113 = vmatprep.subr.mxu0 0.0
    %114 = vmatpush1.msra.mxu0 0.0
    %115 = vmatprep.subr.mxu0 0.0
    %116 = vmatpush1.msra.mxu0 0.0
    %117 = vmatprep.subr.mxu0 0.0
    %118 = vmatpush1.msra.mxu0 0.0
    %119 = vmatprep.subr.mxu0 0.0
    %120 = vmatpush1.msra.mxu0 0.0
    %121 = vmatprep.mubr.f32.mxu0 0.0
    %122 = vmatmul.mubr.f32.gmra.mrb[0].mxu0 %v43
    %v123 = vpop.f32.mrb[0].mxu0
    %v124 = vadd.f32 0.0, %v123
    %v125 = vpop.f32.mrb[0].mxu0
    %126 = vmatprep.mubr.f32.mxu0 0.0
    %127 = vmatmul.mubr.f32.gmra.mrb[0].mxu0 %v46
    %v128 = vpop.f32.mrb[0].mxu0
    %v129 = vadd.f32 0.0, %v128
    %v130 = vpop.f32.mrb[0].mxu0
    %131 = vmatprep.mubr.f32.mxu0 0.0
    %132 = vmatmul.mubr.f32.gmra.mrb[0].mxu0 %v49
    %v133 = vpop.f32.mrb[0].mxu0
    %v134 = vadd.f32 0.0, %v133
    %v135 = vpop.f32.mrb[0].mxu0
    %136 = vmatprep.mubr.f32.mxu0 0.0
    %137 = vmatmul.mubr.f32.gmra.mrb[0].mxu0 %v52
    %v138 = vpop.f32.mrb[0].mxu0
    %v139 = vadd.f32 0.0, %v138
    %v140 = vpop.f32.mrb[0].mxu0
    %141 = vmatprep.mubr.f32.mxu0 0.0
    %142 = vmatmul.mubr.f32.gmra.mrb[0].mxu0 %v55
    %v143 = vpop.f32.mrb[0].mxu0
    %v144 = vadd.f32 0.0, %v143
    %v145 = vpop.f32.mrb[0].mxu0
    %146 = vdwg.mxu0
    %147 = vst [vmem:[#allocation2] sm:$0xff] %v35
    %v148 = vand.u32 2147483647, %v124
    %vm149 = vcmp.le.f32.partialorder %v148, 0.7853982
    %vm150 = vcmp.lt.s32.totalorder %v124, 0
    %v151 = vand.u32 %v124, 2139095040
    %v152 = vshrl.u32 %v151, 23
    %v153 = vsub.s32 %v152, 127
    %v154 = vand.u32 2147483647, %v124
    %v155 = vand.u32 %v154, 8388607
    %v156 = vor.u32 %v155, 8388608
    %v157 = vsub.s32 0, %v156
    %v158 = vadd.s32 %v153, 1
    %vm159 = vcmp.gt.s32.totalorder %v158, 0
    %v160 = vsel %vm159, %v158, 0
    %v161 = vshrl.u32 %v160, 5
    %v162 = vand.u32 %v160, 31
    %v163 = vsub.s32 32, %v162
    %v164 = vshrl.u32 683565275, %v163
    %v165 = vshll.u32 683565275, %v162
    %v166 = vshrl.u32 2475754826, %v163
    %v167 = vor.u32 %v165, %v166
    %v168 = vshll.u32 2475754826, %v162
    %v169 = vshrl.u32 2131351028, %v163
    %v170 = vor.u32 %v168, %v169
    %v171 = vshll.u32 2131351028, %v162
    %v172 = vshrl.u32 2102212464, %v163
    %v173 = vor.u32 %v171, %v172
    %v174 = vshll.u32 2102212464, %v162
    %v175 = vshrl.u32 920167782, %v163
    %v176 = vor.u32 %v174, %v175
    %v177 = vshll.u32 920167782, %v162
    %v178 = vshrl.u32 1326507024, %v163
    %v179 = vor.u32 %v177, %v178
    %vm180 = vcmp.lt.s32.totalorder %v161, 1
    %vm181 = vcmp.lt.s32.totalorder %v161, 2
    %vm182 = vcmp.lt.s32.totalorder %v161, 3
    %vm183 = vcmp.lt.s32.totalorder %v161, 4
    %v184 = vsel %vm180, %v164, %v167
    %v185 = vsel %vm183, %v173, 2102212464
    %v186 = vsel %vm182, %v170, %v185
    %v187 = vsel %vm181, %v184, %v186
    %v188 = vsel %vm180, %v167, %v170
    %v189 = vsel %vm183, %v176, 920167782
    %v190 = vsel %vm182, %v173, %v189
    %v191 = vsel %vm181, %v188, %v190
    %v192 = vsel %vm180, %v170, %v173
    %v193 = vsel %vm183, %v179, 1326507024
    %v194 = vsel %vm182, %v176, %v193
    %v195 = vsel %vm181, %v192, %v194
    %v196 = vshll.u32 %v156, 8
    %v197 = vmul.u32.u64.compose %v196, %v195
    %v198 = vextract.low.u32 %v197
    %v199 = vextract.high.u32 %v197
    %v200 = vmul.u32.u64.compose %v196, %v191
    %v201 = vextract.low.u32 %v200
    %v202 = vextract.high.u32 %v200
    %v203 = vmul.u32 %v196, %v187
    %v204 = vadd.s32 %v199, %v201
    %vm205 = vc.u32 %v199, %v201
    %v206 = vadd.s32 %v202, 1
    %v207 = vsel %vm205, %v206, %v202
    %v208 = vadd.s32 %v203, %v207
    %v209 = vadd.s32 %v208, 536870912
    %v210 = vshrl.u32 %v209, 30
    %v211 = vshll.u32 %v210, 30
    %v212 = vsub.s32 %v208, %v211
    %vm213 = vcmp.lt.s32.totalorder %v212, 0
    %v214 = vsub.s32 0, %v212
    %v215 = vsel %vm213, %v214, %v212
    %v216 = vclz %v215
    %v217 = vsub.s32 %v216, 2
    %vm218 = vcmp.gt.s32.totalorder 0, %v217
    %v219 = vsel %vm218, 0, %v217
    %v220 = vsub.s32 32, %v219
    %v221 = vshll.u32 %v212, %v219
    %v222 = vshrl.u32 %v204, %v220
    %v223 = vor.u32 %v221, %v222
    %v224 = vsub.s32 4294967266, %v219
    %v225 = vadd.s32 %v224, 127
    %v226 = vshll.u32 %v225, 23
    %v227 = vor.u32 4788187, %v226
    %v228 = vand.u32 2147483647, %v227
    %v230 = vcvt.s32.f32 %v223
    %v231 = vmul.f32 %v230, %v228
    %v232 = vxor.u32 %v231, 2147483648
    %v233 = vsel %vm150, %v232, %v231
    %v234 = vsub.s32 4, %v210
    %v235 = vsel %vm150, %v234, %v210
    %v236 = vsel %vm149, %v124, %v233
    %v237 = vsel %vm149, 0, %v235
    %v238 = vcosq.f32.pop %v236
    %v239 = vsinq.f32.pop %v236
    %vm240 = vweird.f32 %v124
    %v241 = vadd.s32 %v237, 3
    %v242 = vand.u32 %v241, 3
    %vm243 = vcmp.lt.s32.totalorder %v242, 2
    %vm244 = vcmp.eq.s32.totalorder %v242, 0
    %v245 = vxor.u32 %v239, 2147483648
    %v246 = vsel %vm244, %v238, %v245
    %vm247 = vcmp.eq.s32.totalorder %v242, 2
    %v248 = vxor.u32 %v238, 2147483648
    %v249 = vsel %vm247, %v248, %v239
    %v250 = vsel %vm243, %v246, %v249
    %v251 = vsel %vm240, nan, %v250
    %v252 = vand.u32 2147483647, %v129
    %vm253 = vcmp.le.f32.partialorder %v252, 0.7853982
    %vm254 = vcmp.lt.s32.totalorder %v129, 0
    %v255 = vand.u32 %v129, 2139095040
    %v256 = vshrl.u32 %v255, 23
    %v257 = vsub.s32 %v256, 127
    %v258 = vand.u32 2147483647, %v129
    %v259 = vand.u32 %v258, 8388607
    %v260 = vor.u32 %v259, 8388608
    %v261 = vsub.s32 0, %v260
    %v262 = vadd.s32 %v257, 1
    %vm263 = vcmp.gt.s32.totalorder %v262, 0
    %v264 = vsel %vm263, %v262, 0
    %v265 = vshrl.u32 %v264, 5
    %v266 = vand.u32 %v264, 31
    %v267 = vsub.s32 32, %v266
    %v268 = vshrl.u32 683565275, %v267
    %v269 = vshll.u32 683565275, %v266
    %v270 = vshrl.u32 2475754826, %v267
    %v271 = vor.u32 %v269, %v270
    %v272 = vshll.u32 2475754826, %v266
    %v273 = vshrl.u32 2131351028, %v267
    %v274 = vor.u32 %v272, %v273
    %v275 = vshll.u32 2131351028, %v266
    %v276 = vshrl.u32 2102212464, %v267
    %v277 = vor.u32 %v275, %v276
    %v278 = vshll.u32 2102212464, %v266
    %v279 = vshrl.u32 920167782, %v267
    %v280 = vor.u32 %v278, %v279
    %v281 = vshll.u32 920167782, %v266
    %v282 = vshrl.u32 1326507024, %v267
    %v283 = vor.u32 %v281, %v282
    %vm284 = vcmp.lt.s32.totalorder %v265, 1
    %vm285 = vcmp.lt.s32.totalorder %v265, 2
    %vm286 = vcmp.lt.s32.totalorder %v265, 3
    %vm287 = vcmp.lt.s32.totalorder %v265, 4
    %v288 = vsel %vm284, %v268, %v271
    %v289 = vsel %vm287, %v277, 2102212464
    %v290 = vsel %vm286, %v274, %v289
    %v291 = vsel %vm285, %v288, %v290
    %v292 = vsel %vm284, %v271, %v274
    %v293 = vsel %vm287, %v280, 920167782
    %v294 = vsel %vm286, %v277, %v293
    %v295 = vsel %vm285, %v292, %v294
    %v296 = vsel %vm284, %v274, %v277
    %v297 = vsel %vm287, %v283, 1326507024
    %v298 = vsel %vm286, %v280, %v297
    %v299 = vsel %vm285, %v296, %v298
    %v300 = vshll.u32 %v260, 8
    %v301 = vmul.u32.u64.compose %v300, %v299
    %v302 = vextract.low.u32 %v301
    %v303 = vextract.high.u32 %v301
    %v304 = vmul.u32.u64.compose %v300, %v295
    %v305 = vextract.low.u32 %v304
    %v306 = vextract.high.u32 %v304
    %v307 = vmul.u32 %v300, %v291
    %v308 = vadd.s32 %v303, %v305
    %vm309 = vc.u32 %v303, %v305
    %v310 = vadd.s32 %v306, 1
    %v311 = vsel %vm309, %v310, %v306
    %v312 = vadd.s32 %v307, %v311
    %v313 = vadd.s32 %v312, 536870912
    %v314 = vshrl.u32 %v313, 30
    %v315 = vshll.u32 %v314, 30
    %v316 = vsub.s32 %v312, %v315
    %vm317 = vcmp.lt.s32.totalorder %v316, 0
    %v318 = vsub.s32 0, %v316
    %v319 = vsel %vm317, %v318, %v316
    %v320 = vclz %v319
    %v321 = vsub.s32 %v320, 2
    %vm322 = vcmp.gt.s32.totalorder 0, %v321
    %v323 = vsel %vm322, 0, %v321
    %v324 = vsub.s32 32, %v323
    %v325 = vshll.u32 %v316, %v323
    %v326 = vshrl.u32 %v308, %v324
    %v327 = vor.u32 %v325, %v326
    %v328 = vsub.s32 4294967266, %v323
    %v329 = vadd.s32 %v328, 127
    %v330 = vshll.u32 %v329, 23
    %v331 = vor.u32 4788187, %v330
    %v332 = vand.u32 2147483647, %v331
    %v334 = vcvt.s32.f32 %v327
    %v335 = vmul.f32 %v334, %v332
    %v336 = vxor.u32 %v335, 2147483648
    %v337 = vsel %vm254, %v336, %v335
    %v338 = vsub.s32 4, %v314
    %v339 = vsel %vm254, %v338, %v314
    %v340 = vsel %vm253, %v129, %v337
    %v341 = vsel %vm253, 0, %v339
    %v342 = vcosq.f32.pop %v340
    %v343 = vsinq.f32.pop %v340
    %vm344 = vweird.f32 %v129
    %v345 = vadd.s32 %v341, 3
    %v346 = vand.u32 %v345, 3
    %vm347 = vcmp.lt.s32.totalorder %v346, 2
    %vm348 = vcmp.eq.s32.totalorder %v346, 0
    %v349 = vxor.u32 %v343, 2147483648
    %v350 = vsel %vm348, %v342, %v349
    %vm351 = vcmp.eq.s32.totalorder %v346, 2
    %v352 = vxor.u32 %v342, 2147483648
    %v353 = vsel %vm351, %v352, %v343
    %v354 = vsel %vm347, %v350, %v353
    %v355 = vsel %vm344, nan, %v354
    %v356 = vand.u32 2147483647, %v134
    %vm357 = vcmp.le.f32.partialorder %v356, 0.7853982
    %vm358 = vcmp.lt.s32.totalorder %v134, 0
    %v359 = vand.u32 %v134, 2139095040
    %v360 = vshrl.u32 %v359, 23
    %v361 = vsub.s32 %v360, 127
    %v362 = vand.u32 2147483647, %v134
    %v363 = vand.u32 %v362, 8388607
    %v364 = vor.u32 %v363, 8388608
    %v365 = vsub.s32 0, %v364
    %v366 = vadd.s32 %v361, 1
    %vm367 = vcmp.gt.s32.totalorder %v366, 0
    %v368 = vsel %vm367, %v366, 0
    %v369 = vshrl.u32 %v368, 5
    %v370 = vand.u32 %v368, 31
    %v371 = vsub.s32 32, %v370
    %v372 = vshrl.u32 683565275, %v371
    %v373 = vshll.u32 683565275, %v370
    %v374 = vshrl.u32 2475754826, %v371
    %v375 = vor.u32 %v373, %v374
    %v376 = vshll.u32 2475754826, %v370
    %v377 = vshrl.u32 2131351028, %v371
    %v378 = vor.u32 %v376, %v377
    %v379 = vshll.u32 2131351028, %v370
    %v380 = vshrl.u32 2102212464, %v371
    %v381 = vor.u32 %v379, %v380
    %v382 = vshll.u32 2102212464, %v370
    %v383 = vshrl.u32 920167782, %v371
    %v384 = vor.u32 %v382, %v383
    %v385 = vshll.u32 920167782, %v370
    %v386 = vshrl.u32 1326507024, %v371
    %v387 = vor.u32 %v385, %v386
    %vm388 = vcmp.lt.s32.totalorder %v369, 1
    %vm389 = vcmp.lt.s32.totalorder %v369, 2
    %vm390 = vcmp.lt.s32.totalorder %v369, 3
    %vm391 = vcmp.lt.s32.totalorder %v369, 4
    %v392 = vsel %vm388, %v372, %v375
    %v393 = vsel %vm391, %v381, 2102212464
    %v394 = vsel %vm390, %v378, %v393
    %v395 = vsel %vm389, %v392, %v394
    %v396 = vsel %vm388, %v375, %v378
    %v397 = vsel %vm391, %v384, 920167782
    %v398 = vsel %vm390, %v381, %v397
    %v399 = vsel %vm389, %v396, %v398
    %v400 = vsel %vm388, %v378, %v381
    %v401 = vsel %vm391, %v387, 1326507024
    %v402 = vsel %vm390, %v384, %v401
    %v403 = vsel %vm389, %v400, %v402
    %v404 = vshll.u32 %v364, 8
    %v405 = vmul.u32.u64.compose %v404, %v403
    %v406 = vextract.low.u32 %v405
    %v407 = vextract.high.u32 %v405
    %v408 = vmul.u32.u64.compose %v404, %v399
    %v409 = vextract.low.u32 %v408
    %v410 = vextract.high.u32 %v408
    %v411 = vmul.u32 %v404, %v395
    %v412 = vadd.s32 %v407, %v409
    %vm413 = vc.u32 %v407, %v409
    %v414 = vadd.s32 %v410, 1
    %v415 = vsel %vm413, %v414, %v410
    %v416 = vadd.s32 %v411, %v415
    %v417 = vadd.s32 %v416, 536870912
    %v418 = vshrl.u32 %v417, 30
    %v419 = vshll.u32 %v418, 30
    %v420 = vsub.s32 %v416, %v419
    %vm421 = vcmp.lt.s32.totalorder %v420, 0
    %v422 = vsub.s32 0, %v420
    %v423 = vsel %vm421, %v422, %v420
    %v424 = vclz %v423
    %v425 = vsub.s32 %v424, 2
    %vm426 = vcmp.gt.s32.totalorder 0, %v425
    %v427 = vsel %vm426, 0, %v425
    %v428 = vsub.s32 32, %v427
    %v429 = vshll.u32 %v420, %v427
    %v430 = vshrl.u32 %v412, %v428
    %v431 = vor.u32 %v429, %v430
    %v432 = vsub.s32 4294967266, %v427
    %v433 = vadd.s32 %v432, 127
    %v434 = vshll.u32 %v433, 23
    %v435 = vor.u32 4788187, %v434
    %v436 = vand.u32 2147483647, %v435
    %v438 = vcvt.s32.f32 %v431
    %v439 = vmul.f32 %v438, %v436
    %v440 = vxor.u32 %v439, 2147483648
    %v441 = vsel %vm358, %v440, %v439
    %v442 = vsub.s32 4, %v418
    %v443 = vsel %vm358, %v442, %v418
    %v444 = vsel %vm357, %v134, %v441
    %v445 = vsel %vm357, 0, %v443
    %v446 = vcosq.f32.pop %v444
    %v447 = vsinq.f32.pop %v444
    %vm448 = vweird.f32 %v134
    %v449 = vadd.s32 %v445, 3
    %v450 = vand.u32 %v449, 3
    %vm451 = vcmp.lt.s32.totalorder %v450, 2
    %vm452 = vcmp.eq.s32.totalorder %v450, 0
    %v453 = vxor.u32 %v447, 2147483648
    %v454 = vsel %vm452, %v446, %v453
    %vm455 = vcmp.eq.s32.totalorder %v450, 2
    %v456 = vxor.u32 %v446, 2147483648
    %v457 = vsel %vm455, %v456, %v447
    %v458 = vsel %vm451, %v454, %v457
    %v459 = vsel %vm448, nan, %v458
    %v460 = vand.u32 2147483647, %v139
    %vm461 = vcmp.le.f32.partialorder %v460, 0.7853982
    %vm462 = vcmp.lt.s32.totalorder %v139, 0
    %v463 = vand.u32 %v139, 2139095040
    %v464 = vshrl.u32 %v463, 23
    %v465 = vsub.s32 %v464, 127
    %v466 = vand.u32 2147483647, %v139
    %v467 = vand.u32 %v466, 8388607
    %v468 = vor.u32 %v467, 8388608
    %v469 = vsub.s32 0, %v468
    %v470 = vadd.s32 %v465, 1
    %vm471 = vcmp.gt.s32.totalorder %v470, 0
    %v472 = vsel %vm471, %v470, 0
    %v473 = vshrl.u32 %v472, 5
    %v474 = vand.u32 %v472, 31
    %v475 = vsub.s32 32, %v474
    %v476 = vshrl.u32 683565275, %v475
    %v477 = vshll.u32 683565275, %v474
    %v478 = vshrl.u32 2475754826, %v475
    %v479 = vor.u32 %v477, %v478
    %v480 = vshll.u32 2475754826, %v474
    %v481 = vshrl.u32 2131351028, %v475
    %v482 = vor.u32 %v480, %v481
    %v483 = vshll.u32 2131351028, %v474
    %v484 = vshrl.u32 2102212464, %v475
    %v485 = vor.u32 %v483, %v484
    %v486 = vshll.u32 2102212464, %v474
    %v487 = vshrl.u32 920167782, %v475
    %v488 = vor.u32 %v486, %v487
    %v489 = vshll.u32 920167782, %v474
    %v490 = vshrl.u32 1326507024, %v475
    %v491 = vor.u32 %v489, %v490
    %vm492 = vcmp.lt.s32.totalorder %v473, 1
    %vm493 = vcmp.lt.s32.totalorder %v473, 2
    %vm494 = vcmp.lt.s32.totalorder %v473, 3
    %vm495 = vcmp.lt.s32.totalorder %v473, 4
    %v496 = vsel %vm492, %v476, %v479
    %v497 = vsel %vm495, %v485, 2102212464
    %v498 = vsel %vm494, %v482, %v497
    %v499 = vsel %vm493, %v496, %v498
    %v500 = vsel %vm492, %v479, %v482
    %v501 = vsel %vm495, %v488, 920167782
    %v502 = vsel %vm494, %v485, %v501
    %v503 = vsel %vm493, %v500, %v502
    %v504 = vsel %vm492, %v482, %v485
    %v505 = vsel %vm495, %v491, 1326507024
    %v506 = vsel %vm494, %v488, %v505
    %v507 = vsel %vm493, %v504, %v506
    %v508 = vshll.u32 %v468, 8
    %v509 = vmul.u32.u64.compose %v508, %v507
    %v510 = vextract.low.u32 %v509
    %v511 = vextract.high.u32 %v509
    %v512 = vmul.u32.u64.compose %v508, %v503
    %v513 = vextract.low.u32 %v512
    %v514 = vextract.high.u32 %v512
    %v515 = vmul.u32 %v508, %v499
    %v516 = vadd.s32 %v511, %v513
    %vm517 = vc.u32 %v511, %v513
    %v518 = vadd.s32 %v514, 1
    %v519 = vsel %vm517, %v518, %v514
    %v520 = vadd.s32 %v515, %v519
    %v521 = vadd.s32 %v520, 536870912
    %v522 = vshrl.u32 %v521, 30
    %v523 = vshll.u32 %v522, 30
    %v524 = vsub.s32 %v520, %v523
    %vm525 = vcmp.lt.s32.totalorder %v524, 0
    %v526 = vsub.s32 0, %v524
    %v527 = vsel %vm525, %v526, %v524
    %v528 = vclz %v527
    %v529 = vsub.s32 %v528, 2
    %vm530 = vcmp.gt.s32.totalorder 0, %v529
    %v531 = vsel %vm530, 0, %v529
    %v532 = vsub.s32 32, %v531
    %v533 = vshll.u32 %v524, %v531
    %v534 = vshrl.u32 %v516, %v532
    %v535 = vor.u32 %v533, %v534
    %v536 = vsub.s32 4294967266, %v531
    %v537 = vadd.s32 %v536, 127
    %v538 = vshll.u32 %v537, 23
    %v539 = vor.u32 4788187, %v538
    %v540 = vand.u32 2147483647, %v539
    %v542 = vcvt.s32.f32 %v535
    %v543 = vmul.f32 %v542, %v540
    %v544 = vxor.u32 %v543, 2147483648
    %v545 = vsel %vm462, %v544, %v543
    %v546 = vsub.s32 4, %v522
    %v547 = vsel %vm462, %v546, %v522
    %v548 = vsel %vm461, %v139, %v545
    %v549 = vsel %vm461, 0, %v547
    %v550 = vcosq.f32.pop %v548
    %v551 = vsinq.f32.pop %v548
    %vm552 = vweird.f32 %v139
    %v553 = vadd.s32 %v549, 3
    %v554 = vand.u32 %v553, 3
    %vm555 = vcmp.lt.s32.totalorder %v554, 2
    %vm556 = vcmp.eq.s32.totalorder %v554, 0
    %v557 = vxor.u32 %v551, 2147483648
    %v558 = vsel %vm556, %v550, %v557
    %vm559 = vcmp.eq.s32.totalorder %v554, 2
    %v560 = vxor.u32 %v550, 2147483648
    %v561 = vsel %vm559, %v560, %v551
    %v562 = vsel %vm555, %v558, %v561
    %v563 = vsel %vm552, nan, %v562
    %v564 = vand.u32 2147483647, %v144
    %vm565 = vcmp.le.f32.partialorder %v564, 0.7853982
    %vm566 = vcmp.lt.s32.totalorder %v144, 0
    %v567 = vand.u32 %v144, 2139095040
    %v568 = vshrl.u32 %v567, 23
    %v569 = vsub.s32 %v568, 127
    %v570 = vand.u32 2147483647, %v144
    %v571 = vand.u32 %v570, 8388607
    %v572 = vor.u32 %v571, 8388608
    %v573 = vsub.s32 0, %v572
    %v574 = vadd.s32 %v569, 1
    %vm575 = vcmp.gt.s32.totalorder %v574, 0
    %v576 = vsel %vm575, %v574, 0
    %v577 = vshrl.u32 %v576, 5
    %v578 = vand.u32 %v576, 31
    %v579 = vsub.s32 32, %v578
    %v580 = vshrl.u32 683565275, %v579
    %v581 = vshll.u32 683565275, %v578
    %v582 = vshrl.u32 2475754826, %v579
    %v583 = vor.u32 %v581, %v582
    %v584 = vshll.u32 2475754826, %v578
    %v585 = vshrl.u32 2131351028, %v579
    %v586 = vor.u32 %v584, %v585
    %v587 = vshll.u32 2131351028, %v578
    %v588 = vshrl.u32 2102212464, %v579
    %v589 = vor.u32 %v587, %v588
    %v590 = vshll.u32 2102212464, %v578
    %v591 = vshrl.u32 920167782, %v579
    %v592 = vor.u32 %v590, %v591
    %v593 = vshll.u32 920167782, %v578
    %v594 = vshrl.u32 1326507024, %v579
    %v595 = vor.u32 %v593, %v594
    %vm596 = vcmp.lt.s32.totalorder %v577, 1
    %vm597 = vcmp.lt.s32.totalorder %v577, 2
    %vm598 = vcmp.lt.s32.totalorder %v577, 3
    %vm599 = vcmp.lt.s32.totalorder %v577, 4
    %v600 = vsel %vm596, %v580, %v583
    %v601 = vsel %vm599, %v589, 2102212464
    %v602 = vsel %vm598, %v586, %v601
    %v603 = vsel %vm597, %v600, %v602
    %v604 = vsel %vm596, %v583, %v586
    %v605 = vsel %vm599, %v592, 920167782
    %v606 = vsel %vm598, %v589, %v605
    %v607 = vsel %vm597, %v604, %v606
    %v608 = vsel %vm596, %v586, %v589
    %v609 = vsel %vm599, %v595, 1326507024
    %v610 = vsel %vm598, %v592, %v609
    %v611 = vsel %vm597, %v608, %v610
    %v612 = vshll.u32 %v572, 8
    %v613 = vmul.u32.u64.compose %v612, %v611
    %v614 = vextract.low.u32 %v613
    %v615 = vextract.high.u32 %v613
    %v616 = vmul.u32.u64.compose %v612, %v607
    %v617 = vextract.low.u32 %v616
    %v618 = vextract.high.u32 %v616
    %v619 = vmul.u32 %v612, %v603
    %v620 = vadd.s32 %v615, %v617
    %vm621 = vc.u32 %v615, %v617
    %v622 = vadd.s32 %v618, 1
    %v623 = vsel %vm621, %v622, %v618
    %v624 = vadd.s32 %v619, %v623
    %v625 = vadd.s32 %v624, 536870912
    %v626 = vshrl.u32 %v625, 30
    %v627 = vshll.u32 %v626, 30
    %v628 = vsub.s32 %v624, %v627
    %vm629 = vcmp.lt.s32.totalorder %v628, 0
    %v630 = vsub.s32 0, %v628
    %v631 = vsel %vm629, %v630, %v628
    %v632 = vclz %v631
    %v633 = vsub.s32 %v632, 2
    %vm634 = vcmp.gt.s32.totalorder 0, %v633
    %v635 = vsel %vm634, 0, %v633
    %v636 = vsub.s32 32, %v635
    %v637 = vshll.u32 %v628, %v635
    %v638 = vshrl.u32 %v620, %v636
    %v639 = vor.u32 %v637, %v638
    %v640 = vsub.s32 4294967266, %v635
    %v641 = vadd.s32 %v640, 127
    %v642 = vshll.u32 %v641, 23
    %v643 = vor.u32 4788187, %v642
    %v644 = vand.u32 2147483647, %v643
    %v646 = vcvt.s32.f32 %v639
    %v647 = vmul.f32 %v646, %v644
    %v648 = vxor.u32 %v647, 2147483648
    %v649 = vsel %vm566, %v648, %v647
    %v650 = vsub.s32 4, %v626
    %v651 = vsel %vm566, %v650, %v626
    %v652 = vsel %vm565, %v144, %v649
    %v653 = vsel %vm565, 0, %v651
    %v654 = vcosq.f32.pop %v652
    %v655 = vsinq.f32.pop %v652
    %vm656 = vweird.f32 %v144
    %v657 = vadd.s32 %v653, 3
    %v658 = vand.u32 %v657, 3
    %vm659 = vcmp.lt.s32.totalorder %v658, 2
    %vm660 = vcmp.eq.s32.totalorder %v658, 0
    %v661 = vxor.u32 %v655, 2147483648
    %v662 = vsel %vm660, %v654, %v661
    %vm663 = vcmp.eq.s32.totalorder %v658, 2
    %v664 = vxor.u32 %v654, 2147483648
    %v665 = vsel %vm663, %v664, %v655
    %v666 = vsel %vm659, %v662, %v665
    %v667 = vsel %vm656, nan, %v666
    %668 = vst [vmem:[#allocation2 + $0x8] sm:$0xff] %v251
    %669 = vst [vmem:[#allocation2 + $0x10] sm:$0xff] %v355
    %670 = vst [vmem:[#allocation2 + $0x18] sm:$0xff] %v459
    %671 = vst [vmem:[#allocation2 + $0x20] sm:$0xff] %v563
    %672 = vst [vmem:[#allocation2 + $0x28] sm:$0xff] %v667
    %v673 = vand.u32 2147483647, %v124
    %vm674 = vcmp.le.f32.partialorder %v673, 0.7853982
    %vm675 = vcmp.lt.s32.totalorder %v124, 0
    %v676 = vand.u32 %v124, 2139095040
    %v677 = vshrl.u32 %v676, 23
    %v678 = vsub.s32 %v677, 127
    %v679 = vand.u32 2147483647, %v124
    %v680 = vand.u32 %v679, 8388607
    %v681 = vor.u32 %v680, 8388608
    %v682 = vsub.s32 0, %v681
    %v683 = vadd.s32 %v678, 1
    %vm684 = vcmp.gt.s32.totalorder %v683, 0
    %v685 = vsel %vm684, %v683, 0
    %v686 = vshrl.u32 %v685, 5
    %v687 = vand.u32 %v685, 31
    %v688 = vsub.s32 32, %v687
    %v689 = vshrl.u32 683565275, %v688
    %v690 = vshll.u32 683565275, %v687
    %v691 = vshrl.u32 2475754826, %v688
    %v692 = vor.u32 %v690, %v691
    %v693 = vshll.u32 2475754826, %v687
    %v694 = vshrl.u32 2131351028, %v688
    %v695 = vor.u32 %v693, %v694
    %v696 = vshll.u32 2131351028, %v687
    %v697 = vshrl.u32 2102212464, %v688
    %v698 = vor.u32 %v696, %v697
    %v699 = vshll.u32 2102212464, %v687
    %v700 = vshrl.u32 920167782, %v688
    %v701 = vor.u32 %v699, %v700
    %v702 = vshll.u32 920167782, %v687
    %v703 = vshrl.u32 1326507024, %v688
    %v704 = vor.u32 %v702, %v703
    %vm705 = vcmp.lt.s32.totalorder %v686, 1
    %vm706 = vcmp.lt.s32.totalorder %v686, 2
    %vm707 = vcmp.lt.s32.totalorder %v686, 3
    %vm708 = vcmp.lt.s32.totalorder %v686, 4
    %v709 = vsel %vm705, %v689, %v692
    %v710 = vsel %vm708, %v698, 2102212464
    %v711 = vsel %vm707, %v695, %v710
    %v712 = vsel %vm706, %v709, %v711
    %v713 = vsel %vm705, %v692, %v695
    %v714 = vsel %vm708, %v701, 920167782
    %v715 = vsel %vm707, %v698, %v714
    %v716 = vsel %vm706, %v713, %v715
    %v717 = vsel %vm705, %v695, %v698
    %v718 = vsel %vm708, %v704, 1326507024
    %v719 = vsel %vm707, %v701, %v718
    %v720 = vsel %vm706, %v717, %v719
    %v721 = vshll.u32 %v681, 8
    %v722 = vmul.u32.u64.compose %v721, %v720
    %v723 = vextract.low.u32 %v722
    %v724 = vextract.high.u32 %v722
    %v725 = vmul.u32.u64.compose %v721, %v716
    %v726 = vextract.low.u32 %v725
    %v727 = vextract.high.u32 %v725
    %v728 = vmul.u32 %v721, %v712
    %v729 = vadd.s32 %v724, %v726
    %vm730 = vc.u32 %v724, %v726
    %v731 = vadd.s32 %v727, 1
    %v732 = vsel %vm730, %v731, %v727
    %v733 = vadd.s32 %v728, %v732
    %v734 = vadd.s32 %v733, 536870912
    %v735 = vshrl.u32 %v734, 30
    %v736 = vshll.u32 %v735, 30
    %v737 = vsub.s32 %v733, %v736
    %vm738 = vcmp.lt.s32.totalorder %v737, 0
    %v739 = vsub.s32 0, %v737
    %v740 = vsel %vm738, %v739, %v737
    %v741 = vclz %v740
    %v742 = vsub.s32 %v741, 2
    %vm743 = vcmp.gt.s32.totalorder 0, %v742
    %v744 = vsel %vm743, 0, %v742
    %v745 = vsub.s32 32, %v744
    %v746 = vshll.u32 %v737, %v744
    %v747 = vshrl.u32 %v729, %v745
    %v748 = vor.u32 %v746, %v747
    %v749 = vsub.s32 4294967266, %v744
    %v750 = vadd.s32 %v749, 127
    %v751 = vshll.u32 %v750, 23
    %v752 = vor.u32 4788187, %v751
    %v753 = vand.u32 2147483647, %v752
    %v755 = vcvt.s32.f32 %v748
    %v756 = vmul.f32 %v755, %v753
    %v757 = vxor.u32 %v756, 2147483648
    %v758 = vsel %vm675, %v757, %v756
    %v759 = vsub.s32 4, %v735
    %v760 = vsel %vm675, %v759, %v735
    %v761 = vsel %vm674, %v124, %v758
    %v762 = vsel %vm674, 0, %v760
    %v763 = vcosq.f32.pop %v761
    %v764 = vsinq.f32.pop %v761
    %vm765 = vweird.f32 %v124
    %v766 = vand.u32 %v762, 3
    %vm767 = vcmp.lt.s32.totalorder %v766, 2
    %vm768 = vcmp.eq.s32.totalorder %v766, 0
    %v769 = vxor.u32 %v764, 2147483648
    %v770 = vsel %vm768, %v763, %v769
    %vm771 = vcmp.eq.s32.totalorder %v766, 2
    %v772 = vxor.u32 %v763, 2147483648
    %v773 = vsel %vm771, %v772, %v764
    %v774 = vsel %vm767, %v770, %v773
    %v775 = vsel %vm765, nan, %v774
    %v776 = vand.u32 2147483647, %v129
    %vm777 = vcmp.le.f32.partialorder %v776, 0.7853982
    %vm778 = vcmp.lt.s32.totalorder %v129, 0
    %v779 = vand.u32 %v129, 2139095040
    %v780 = vshrl.u32 %v779, 23
    %v781 = vsub.s32 %v780, 127
    %v782 = vand.u32 2147483647, %v129
    %v783 = vand.u32 %v782, 8388607
    %v784 = vor.u32 %v783, 8388608
    %v785 = vsub.s32 0, %v784
    %v786 = vadd.s32 %v781, 1
    %vm787 = vcmp.gt.s32.totalorder %v786, 0
    %v788 = vsel %vm787, %v786, 0
    %v789 = vshrl.u32 %v788, 5
    %v790 = vand.u32 %v788, 31
    %v791 = vsub.s32 32, %v790
    %v792 = vshrl.u32 683565275, %v791
    %v793 = vshll.u32 683565275, %v790
    %v794 = vshrl.u32 2475754826, %v791
    %v795 = vor.u32 %v793, %v794
    %v796 = vshll.u32 2475754826, %v790
    %v797 = vshrl.u32 2131351028, %v791
    %v798 = vor.u32 %v796, %v797
    %v799 = vshll.u32 2131351028, %v790
    %v800 = vshrl.u32 2102212464, %v791
    %v801 = vor.u32 %v799, %v800
    %v802 = vshll.u32 2102212464, %v790
    %v803 = vshrl.u32 920167782, %v791
    %v804 = vor.u32 %v802, %v803
    %v805 = vshll.u32 920167782, %v790
    %v806 = vshrl.u32 1326507024, %v791
    %v807 = vor.u32 %v805, %v806
    %vm808 = vcmp.lt.s32.totalorder %v789, 1
    %vm809 = vcmp.lt.s32.totalorder %v789, 2
    %vm810 = vcmp.lt.s32.totalorder %v789, 3
    %vm811 = vcmp.lt.s32.totalorder %v789, 4
    %v812 = vsel %vm808, %v792, %v795
    %v813 = vsel %vm811, %v801, 2102212464
    %v814 = vsel %vm810, %v798, %v813
    %v815 = vsel %vm809, %v812, %v814
    %v816 = vsel %vm808, %v795, %v798
    %v817 = vsel %vm811, %v804, 920167782
    %v818 = vsel %vm810, %v801, %v817
    %v819 = vsel %vm809, %v816, %v818
    %v820 = vsel %vm808, %v798, %v801
    %v821 = vsel %vm811, %v807, 1326507024
    %v822 = vsel %vm810, %v804, %v821
    %v823 = vsel %vm809, %v820, %v822
    %v824 = vshll.u32 %v784, 8
    %v825 = vmul.u32.u64.compose %v824, %v823
    %v826 = vextract.low.u32 %v825
    %v827 = vextract.high.u32 %v825
    %v828 = vmul.u32.u64.compose %v824, %v819
    %v829 = vextract.low.u32 %v828
    %v830 = vextract.high.u32 %v828
    %v831 = vmul.u32 %v824, %v815
    %v832 = vadd.s32 %v827, %v829
    %vm833 = vc.u32 %v827, %v829
    %v834 = vadd.s32 %v830, 1
    %v835 = vsel %vm833, %v834, %v830
    %v836 = vadd.s32 %v831, %v835
    %v837 = vadd.s32 %v836, 536870912
    %v838 = vshrl.u32 %v837, 30
    %v839 = vshll.u32 %v838, 30
    %v840 = vsub.s32 %v836, %v839
    %vm841 = vcmp.lt.s32.totalorder %v840, 0
    %v842 = vsub.s32 0, %v840
    %v843 = vsel %vm841, %v842, %v840
    %v844 = vclz %v843
    %v845 = vsub.s32 %v844, 2
    %vm846 = vcmp.gt.s32.totalorder 0, %v845
    %v847 = vsel %vm846, 0, %v845
    %v848 = vsub.s32 32, %v847
    %v849 = vshll.u32 %v840, %v847
    %v850 = vshrl.u32 %v832, %v848
    %v851 = vor.u32 %v849, %v850
    %v852 = vsub.s32 4294967266, %v847
    %v853 = vadd.s32 %v852, 127
    %v854 = vshll.u32 %v853, 23
    %v855 = vor.u32 4788187, %v854
    %v856 = vand.u32 2147483647, %v855
    %v858 = vcvt.s32.f32 %v851
    %v859 = vmul.f32 %v858, %v856
    %v860 = vxor.u32 %v859, 2147483648
    %v861 = vsel %vm778, %v860, %v859
    %v862 = vsub.s32 4, %v838
    %v863 = vsel %vm778, %v862, %v838
    %v864 = vsel %vm777, %v129, %v861
    %v865 = vsel %vm777, 0, %v863
    %v866 = vcosq.f32.pop %v864
    %v867 = vsinq.f32.pop %v864
    %vm868 = vweird.f32 %v129
    %v869 = vand.u32 %v865, 3
    %vm870 = vcmp.lt.s32.totalorder %v869, 2
    %vm871 = vcmp.eq.s32.totalorder %v869, 0
    %v872 = vxor.u32 %v867, 2147483648
    %v873 = vsel %vm871, %v866, %v872
    %vm874 = vcmp.eq.s32.totalorder %v869, 2
    %v875 = vxor.u32 %v866, 2147483648
    %v876 = vsel %vm874, %v875, %v867
    %v877 = vsel %vm870, %v873, %v876
    %v878 = vsel %vm868, nan, %v877
    %v879 = vand.u32 2147483647, %v134
    %vm880 = vcmp.le.f32.partialorder %v879, 0.7853982
    %vm881 = vcmp.lt.s32.totalorder %v134, 0
    %v882 = vand.u32 %v134, 2139095040
    %v883 = vshrl.u32 %v882, 23
    %v884 = vsub.s32 %v883, 127
    %v885 = vand.u32 2147483647, %v134
    %v886 = vand.u32 %v885, 8388607
    %v887 = vor.u32 %v886, 8388608
    %v888 = vsub.s32 0, %v887
    %v889 = vadd.s32 %v884, 1
    %vm890 = vcmp.gt.s32.totalorder %v889, 0
    %v891 = vsel %vm890, %v889, 0
    %v892 = vshrl.u32 %v891, 5
    %v893 = vand.u32 %v891, 31
    %v894 = vsub.s32 32, %v893
    %v895 = vshrl.u32 683565275, %v894
    %v896 = vshll.u32 683565275, %v893
    %v897 = vshrl.u32 2475754826, %v894
    %v898 = vor.u32 %v896, %v897
    %v899 = vshll.u32 2475754826, %v893
    %v900 = vshrl.u32 2131351028, %v894
    %v901 = vor.u32 %v899, %v900
    %v902 = vshll.u32 2131351028, %v893
    %v903 = vshrl.u32 2102212464, %v894
    %v904 = vor.u32 %v902, %v903
    %v905 = vshll.u32 2102212464, %v893
    %v906 = vshrl.u32 920167782, %v894
    %v907 = vor.u32 %v905, %v906
    %v908 = vshll.u32 920167782, %v893
    %v909 = vshrl.u32 1326507024, %v894
    %v910 = vor.u32 %v908, %v909
    %vm911 = vcmp.lt.s32.totalorder %v892, 1
    %vm912 = vcmp.lt.s32.totalorder %v892, 2
    %vm913 = vcmp.lt.s32.totalorder %v892, 3
    %vm914 = vcmp.lt.s32.totalorder %v892, 4
    %v915 = vsel %vm911, %v895, %v898
    %v916 = vsel %vm914, %v904, 2102212464
    %v917 = vsel %vm913, %v901, %v916
    %v918 = vsel %vm912, %v915, %v917
    %v919 = vsel %vm911, %v898, %v901
    %v920 = vsel %vm914, %v907, 920167782
    %v921 = vsel %vm913, %v904, %v920
    %v922 = vsel %vm912, %v919, %v921
    %v923 = vsel %vm911, %v901, %v904
    %v924 = vsel %vm914, %v910, 1326507024
    %v925 = vsel %vm913, %v907, %v924
    %v926 = vsel %vm912, %v923, %v925
    %v927 = vshll.u32 %v887, 8
    %v928 = vmul.u32.u64.compose %v927, %v926
    %v929 = vextract.low.u32 %v928
    %v930 = vextract.high.u32 %v928
    %v931 = vmul.u32.u64.compose %v927, %v922
    %v932 = vextract.low.u32 %v931
    %v933 = vextract.high.u32 %v931
    %v934 = vmul.u32 %v927, %v918
    %v935 = vadd.s32 %v930, %v932
    %vm936 = vc.u32 %v930, %v932
    %v937 = vadd.s32 %v933, 1
    %v938 = vsel %vm936, %v937, %v933
    %v939 = vadd.s32 %v934, %v938
    %v940 = vadd.s32 %v939, 536870912
    %v941 = vshrl.u32 %v940, 30
    %v942 = vshll.u32 %v941, 30
    %v943 = vsub.s32 %v939, %v942
    %vm944 = vcmp.lt.s32.totalorder %v943, 0
    %v945 = vsub.s32 0, %v943
    %v946 = vsel %vm944, %v945, %v943
    %v947 = vclz %v946
    %v948 = vsub.s32 %v947, 2
    %vm949 = vcmp.gt.s32.totalorder 0, %v948
    %v950 = vsel %vm949, 0, %v948
    %v951 = vsub.s32 32, %v950
    %v952 = vshll.u32 %v943, %v950
    %v953 = vshrl.u32 %v935, %v951
    %v954 = vor.u32 %v952, %v953
    %v955 = vsub.s32 4294967266, %v950
    %v956 = vadd.s32 %v955, 127
    %v957 = vshll.u32 %v956, 23
    %v958 = vor.u32 4788187, %v957
    %v959 = vand.u32 2147483647, %v958
    %v961 = vcvt.s32.f32 %v954
    %v962 = vmul.f32 %v961, %v959
    %v963 = vxor.u32 %v962, 2147483648
    %v964 = vsel %vm881, %v963, %v962
    %v965 = vsub.s32 4, %v941
    %v966 = vsel %vm881, %v965, %v941
    %v967 = vsel %vm880, %v134, %v964
    %v968 = vsel %vm880, 0, %v966
    %v969 = vcosq.f32.pop %v967
    %v970 = vsinq.f32.pop %v967
    %vm971 = vweird.f32 %v134
    %v972 = vand.u32 %v968, 3
    %vm973 = vcmp.lt.s32.totalorder %v972, 2
    %vm974 = vcmp.eq.s32.totalorder %v972, 0
    %v975 = vxor.u32 %v970, 2147483648
    %v976 = vsel %vm974, %v969, %v975
    %vm977 = vcmp.eq.s32.totalorder %v972, 2
    %v978 = vxor.u32 %v969, 2147483648
    %v979 = vsel %vm977, %v978, %v970
    %v980 = vsel %vm973, %v976, %v979
    %v981 = vsel %vm971, nan, %v980
    %v982 = vand.u32 2147483647, %v139
    %vm983 = vcmp.le.f32.partialorder %v982, 0.7853982
    %vm984 = vcmp.lt.s32.totalorder %v139, 0
    %v985 = vand.u32 %v139, 2139095040
    %v986 = vshrl.u32 %v985, 23
    %v987 = vsub.s32 %v986, 127
    %v988 = vand.u32 2147483647, %v139
    %v989 = vand.u32 %v988, 8388607
    %v990 = vor.u32 %v989, 8388608
    %v991 = vsub.s32 0, %v990
    %v992 = vadd.s32 %v987, 1
    %vm993 = vcmp.gt.s32.totalorder %v992, 0
    %v994 = vsel %vm993, %v992, 0
    %v995 = vshrl.u32 %v994, 5
    %v996 = vand.u32 %v994, 31
    %v997 = vsub.s32 32, %v996
    %v998 = vshrl.u32 683565275, %v997
    %v999 = vshll.u32 683565275, %v996
    %v1000 = vshrl.u32 2475754826, %v997
    %v1001 = vor.u32 %v999, %v1000
    %v1002 = vshll.u32 2475754826, %v996
    %v1003 = vshrl.u32 2131351028, %v997
    %v1004 = vor.u32 %v1002, %v1003
    %v1005 = vshll.u32 2131351028, %v996
    %v1006 = vshrl.u32 2102212464, %v997
    %v1007 = vor.u32 %v1005, %v1006
    %v1008 = vshll.u32 2102212464, %v996
    %v1009 = vshrl.u32 920167782, %v997
    %v1010 = vor.u32 %v1008, %v1009
    %v1011 = vshll.u32 920167782, %v996
    %v1012 = vshrl.u32 1326507024, %v997
    %v1013 = vor.u32 %v1011, %v1012
    %vm1014 = vcmp.lt.s32.totalorder %v995, 1
    %vm1015 = vcmp.lt.s32.totalorder %v995, 2
    %vm1016 = vcmp.lt.s32.totalorder %v995, 3
    %vm1017 = vcmp.lt.s32.totalorder %v995, 4
    %v1018 = vsel %vm1014, %v998, %v1001
    %v1019 = vsel %vm1017, %v1007, 2102212464
    %v1020 = vsel %vm1016, %v1004, %v1019
    %v1021 = vsel %vm1015, %v1018, %v1020
    %v1022 = vsel %vm1014, %v1001, %v1004
    %v1023 = vsel %vm1017, %v1010, 920167782
    %v1024 = vsel %vm1016, %v1007, %v1023
    %v1025 = vsel %vm1015, %v1022, %v1024
    %v1026 = vsel %vm1014, %v1004, %v1007
    %v1027 = vsel %vm1017, %v1013, 1326507024
    %v1028 = vsel %vm1016, %v1010, %v1027
    %v1029 = vsel %vm1015, %v1026, %v1028
    %v1030 = vshll.u32 %v990, 8
    %v1031 = vmul.u32.u64.compose %v1030, %v1029
    %v1032 = vextract.low.u32 %v1031
    %v1033 = vextract.high.u32 %v1031
    %v1034 = vmul.u32.u64.compose %v1030, %v1025
    %v1035 = vextract.low.u32 %v1034
    %v1036 = vextract.high.u32 %v1034
    %v1037 = vmul.u32 %v1030, %v1021
    %v1038 = vadd.s32 %v1033, %v1035
    %vm1039 = vc.u32 %v1033, %v1035
    %v1040 = vadd.s32 %v1036, 1
    %v1041 = vsel %vm1039, %v1040, %v1036
    %v1042 = vadd.s32 %v1037, %v1041
    %v1043 = vadd.s32 %v1042, 536870912
    %v1044 = vshrl.u32 %v1043, 30
    %v1045 = vshll.u32 %v1044, 30
    %v1046 = vsub.s32 %v1042, %v1045
    %vm1047 = vcmp.lt.s32.totalorder %v1046, 0
    %v1048 = vsub.s32 0, %v1046
    %v1049 = vsel %vm1047, %v1048, %v1046
    %v1050 = vclz %v1049
    %v1051 = vsub.s32 %v1050, 2
    %vm1052 = vcmp.gt.s32.totalorder 0, %v1051
    %v1053 = vsel %vm1052, 0, %v1051
    %v1054 = vsub.s32 32, %v1053
    %v1055 = vshll.u32 %v1046, %v1053
    %v1056 = vshrl.u32 %v1038, %v1054
    %v1057 = vor.u32 %v1055, %v1056
    %v1058 = vsub.s32 4294967266, %v1053
    %v1059 = vadd.s32 %v1058, 127
    %v1060 = vshll.u32 %v1059, 23
    %v1061 = vor.u32 4788187, %v1060
    %v1062 = vand.u32 2147483647, %v1061
    %v1064 = vcvt.s32.f32 %v1057
    %v1065 = vmul.f32 %v1064, %v1062
    %v1066 = vxor.u32 %v1065, 2147483648
    %v1067 = vsel %vm984, %v1066, %v1065
    %v1068 = vsub.s32 4, %v1044
    %v1069 = vsel %vm984, %v1068, %v1044
    %v1070 = vsel %vm983, %v139, %v1067
    %v1071 = vsel %vm983, 0, %v1069
    %v1072 = vcosq.f32.pop %v1070
    %v1073 = vsinq.f32.pop %v1070
    %vm1074 = vweird.f32 %v139
    %v1075 = vand.u32 %v1071, 3
    %vm1076 = vcmp.lt.s32.totalorder %v1075, 2
    %vm1077 = vcmp.eq.s32.totalorder %v1075, 0
    %v1078 = vxor.u32 %v1073, 2147483648
    %v1079 = vsel %vm1077, %v1072, %v1078
    %vm1080 = vcmp.eq.s32.totalorder %v1075, 2
    %v1081 = vxor.u32 %v1072, 2147483648
    %v1082 = vsel %vm1080, %v1081, %v1073
    %v1083 = vsel %vm1076, %v1079, %v1082
    %v1084 = vsel %vm1074, nan, %v1083
    %v1085 = vand.u32 2147483647, %v144
    %vm1086 = vcmp.le.f32.partialorder %v1085, 0.7853982
    %vm1087 = vcmp.lt.s32.totalorder %v144, 0
    %v1088 = vand.u32 %v144, 2139095040
    %v1089 = vshrl.u32 %v1088, 23
    %v1090 = vsub.s32 %v1089, 127
    %v1091 = vand.u32 2147483647, %v144
    %v1092 = vand.u32 %v1091, 8388607
    %v1093 = vor.u32 %v1092, 8388608
    %v1094 = vsub.s32 0, %v1093
    %v1095 = vadd.s32 %v1090, 1
    %vm1096 = vcmp.gt.s32.totalorder %v1095, 0
    %v1097 = vsel %vm1096, %v1095, 0
    %v1098 = vshrl.u32 %v1097, 5
    %v1099 = vand.u32 %v1097, 31
    %v1100 = vsub.s32 32, %v1099
    %v1101 = vshrl.u32 683565275, %v1100
    %v1102 = vshll.u32 683565275, %v1099
    %v1103 = vshrl.u32 2475754826, %v1100
    %v1104 = vor.u32 %v1102, %v1103
    %v1105 = vshll.u32 2475754826, %v1099
    %v1106 = vshrl.u32 2131351028, %v1100
    %v1107 = vor.u32 %v1105, %v1106
    %v1108 = vshll.u32 2131351028, %v1099
    %v1109 = vshrl.u32 2102212464, %v1100
    %v1110 = vor.u32 %v1108, %v1109
    %v1111 = vshll.u32 2102212464, %v1099
    %v1112 = vshrl.u32 920167782, %v1100
    %v1113 = vor.u32 %v1111, %v1112
    %v1114 = vshll.u32 920167782, %v1099
    %v1115 = vshrl.u32 1326507024, %v1100
    %v1116 = vor.u32 %v1114, %v1115
    %vm1117 = vcmp.lt.s32.totalorder %v1098, 1
    %vm1118 = vcmp.lt.s32.totalorder %v1098, 2
    %vm1119 = vcmp.lt.s32.totalorder %v1098, 3
    %vm1120 = vcmp.lt.s32.totalorder %v1098, 4
    %v1121 = vsel %vm1117, %v1101, %v1104
    %v1122 = vsel %vm1120, %v1110, 2102212464
    %v1123 = vsel %vm1119, %v1107, %v1122
    %v1124 = vsel %vm1118, %v1121, %v1123
    %v1125 = vsel %vm1117, %v1104, %v1107
    %v1126 = vsel %vm1120, %v1113, 920167782
    %v1127 = vsel %vm1119, %v1110, %v1126
    %v1128 = vsel %vm1118, %v1125, %v1127
    %v1129 = vsel %vm1117, %v1107, %v1110
    %v1130 = vsel %vm1120, %v1116, 1326507024
    %v1131 = vsel %vm1119, %v1113, %v1130
    %v1132 = vsel %vm1118, %v1129, %v1131
    %v1133 = vshll.u32 %v1093, 8
    %v1134 = vmul.u32.u64.compose %v1133, %v1132
    %v1135 = vextract.low.u32 %v1134
    %v1136 = vextract.high.u32 %v1134
    %v1137 = vmul.u32.u64.compose %v1133, %v1128
    %v1138 = vextract.low.u32 %v1137
    %v1139 = vextract.high.u32 %v1137
    %v1140 = vmul.u32 %v1133, %v1124
    %v1141 = vadd.s32 %v1136, %v1138
    %vm1142 = vc.u32 %v1136, %v1138
    %v1143 = vadd.s32 %v1139, 1
    %v1144 = vsel %vm1142, %v1143, %v1139
    %v1145 = vadd.s32 %v1140, %v1144
    %v1146 = vadd.s32 %v1145, 536870912
    %v1147 = vshrl.u32 %v1146, 30
    %v1148 = vshll.u32 %v1147, 30
    %v1149 = vsub.s32 %v1145, %v1148
    %vm1150 = vcmp.lt.s32.totalorder %v1149, 0
    %v1151 = vsub.s32 0, %v1149
    %v1152 = vsel %vm1150, %v1151, %v1149
    %v1153 = vclz %v1152
    %v1154 = vsub.s32 %v1153, 2
    %vm1155 = vcmp.gt.s32.totalorder 0, %v1154
    %v1156 = vsel %vm1155, 0, %v1154
    %v1157 = vsub.s32 32, %v1156
    %v1158 = vshll.u32 %v1149, %v1156
    %v1159 = vshrl.u32 %v1141, %v1157
    %v1160 = vor.u32 %v1158, %v1159
    %v1161 = vsub.s32 4294967266, %v1156
    %v1162 = vadd.s32 %v1161, 127
    %v1163 = vshll.u32 %v1162, 23
    %v1164 = vor.u32 4788187, %v1163
    %v1165 = vand.u32 2147483647, %v1164
    %v1167 = vcvt.s32.f32 %v1160
    %v1168 = vmul.f32 %v1167, %v1165
    %v1169 = vxor.u32 %v1168, 2147483648
    %v1170 = vsel %vm1087, %v1169, %v1168
    %v1171 = vsub.s32 4, %v1147
    %v1172 = vsel %vm1087, %v1171, %v1147
    %v1173 = vsel %vm1086, %v144, %v1170
    %v1174 = vsel %vm1086, 0, %v1172
    %v1175 = vcosq.f32.pop %v1173
    %v1176 = vsinq.f32.pop %v1173
    %vm1177 = vweird.f32 %v144
    %v1178 = vand.u32 %v1174, 3
    %vm1179 = vcmp.lt.s32.totalorder %v1178, 2
    %vm1180 = vcmp.eq.s32.totalorder %v1178, 0
    %v1181 = vxor.u32 %v1176, 2147483648
    %v1182 = vsel %vm1180, %v1175, %v1181
    %vm1183 = vcmp.eq.s32.totalorder %v1178, 2
    %v1184 = vxor.u32 %v1175, 2147483648
    %v1185 = vsel %vm1183, %v1184, %v1176
    %v1186 = vsel %vm1179, %v1182, %v1185
    %v1187 = vsel %vm1177, nan, %v1186
    %1188 = vst [vmem:[#allocation2 + $0x30] sm:$0xff] %v775
    %1189 = vst [vmem:[#allocation2 + $0x38] sm:$0xff] %v878
    %1190 = vst [vmem:[#allocation2 + $0x40] sm:$0xff] %v981
    %1191 = vst [vmem:[#allocation2 + $0x48] sm:$0xff] %v1084
    %1192 = vst [vmem:[#allocation2 + $0x50] sm:$0xff] %v1187
    %v1193 = vld [vmem:[#allocation3] sm:$0xff]
    %v1194 = vld [vmem:[#allocation3 + $0x8] sm:$0xff]
    %v1195 = vld [vmem:[#allocation3 + $0x10] sm:$0xff]
    %v1196 = vld [vmem:[#allocation3 + $0x18] sm:$0xff]
    %v1197 = vld [vmem:[#allocation3 + $0x20] sm:$0xff]
    %v1198 = vld [vmem:[#allocation3 + $0x28] sm:$0xff]
    %v1199 = vld [vmem:[#allocation3 + $0x30] sm:$0xff]
    %v1200 = vld [vmem:[#allocation3 + $0x38] sm:$0xff]
    %v1201 = vld [vmem:[#allocation3 + $0x40] sm:$0xff]
    %v1202 = vld [vmem:[#allocation3 + $0x48] sm:$0xff]
    %v1203 = vld [vmem:[#allocation3 + $0x50] sm:$0xff]
    %v1204 = vld [vmem:[#allocation3 + $0x58] sm:$0xff]
    %v1205 = vld [vmem:[#allocation3 + $0x60] sm:$0xff]
    %v1206 = vld [vmem:[#allocation3 + $0x68] sm:$0xff]
    %v1207 = vld [vmem:[#allocation3 + $0x70] sm:$0xff]
    %v1208 = vld [vmem:[#allocation3 + $0x78] sm:$0xff]
    %v1209 = vld [vmem:[#allocation3 + $0x80] sm:$0xff]
    %v1210 = vld [vmem:[#allocation3 + $0x88] sm:$0xff]
    %v1211 = vld [vmem:[#allocation2] sm:$0xff]
    %v1212 = vld [vmem:[#allocation2 + $0x8] sm:$0xff]
    %v1213 = vld [vmem:[#allocation2 + $0x10] sm:$0xff]
    %v1214 = vld [vmem:[#allocation2 + $0x18] sm:$0xff]
    %v1215 = vld [vmem:[#allocation2 + $0x20] sm:$0xff]
    %v1216 = vld [vmem:[#allocation2 + $0x28] sm:$0xff]
    %v1217 = vld [vmem:[#allocation2 + $0x30] sm:$0xff]
    %v1218 = vld [vmem:[#allocation2 + $0x38] sm:$0xff]
    %v1219 = vld [vmem:[#allocation2 + $0x40] sm:$0xff]
    %v1220 = vld [vmem:[#allocation2 + $0x48] sm:$0xff]
    %v1221 = vld [vmem:[#allocation2 + $0x50] sm:$0xff]
    %vm1222 = vcmask 719872
    %v1224 = vsel %vm1222, %v1193, 0
    %v1227 = vsel %vm1222, %v1194, 0
    %v1230 = vsel %vm1222, %v1195, 0
    %v1233 = vsel %vm1222, %v1196, 0
    %v1236 = vsel %vm1222, %v1197, 0
    %v1239 = vsel %vm1222, %v1198, 0
    %v1242 = vsel %vm1222, %v1199, 0
    %v1245 = vsel %vm1222, %v1200, 0
    %v1248 = vsel %vm1222, %v1201, 0
    %v1251 = vsel %vm1222, %v1202, 0
    %v1254 = vsel %vm1222, %v1203, 0
    %v1257 = vsel %vm1222, %v1204, 0
    %v1260 = vsel %vm1222, %v1205, 0
    %v1263 = vsel %vm1222, %v1206, 0
    %v1266 = vsel %vm1222, %v1207, 0
    %v1269 = vsel %vm1222, %v1208, 0
    %v1272 = vsel %vm1222, %v1209, 0
    %v1275 = vsel %vm1222, %v1210, 0
    %1277 = vmatprep.subr.mxu0 0.0
    %1278 = vmatpush1.msra.mxu0 %v1211
    %1279 = vmatprep.subr.mxu0 0.0
    %1280 = vmatpush1.msra.mxu0 %v1212
    %1281 = vmatprep.subr.mxu0 0.0
    %1282 = vmatpush1.msra.mxu0 %v1213
    %1283 = vmatprep.subr.mxu0 0.0
    %1284 = vmatpush1.msra.mxu0 %v1214
    %1285 = vmatprep.subr.mxu0 0.0
    %1286 = vmatpush1.msra.mxu0 %v1215
    %1287 = vmatprep.subr.mxu0 0.0
    %1288 = vmatpush1.msra.mxu0 %v1216
    %1289 = vmatprep.subr.mxu0 0.0
    %1290 = vmatpush1.msra.mxu0 %v1217
    %1291 = vmatprep.subr.mxu0 0.0
    %1292 = vmatpush1.msra.mxu0 %v1218
    %1293 = vmatprep.subr.mxu0 0.0
    %1294 = vmatpush1.msra.mxu0 %v1219
    %1295 = vmatprep.subr.mxu0 0.0
    %1296 = vmatpush1.msra.mxu0 %v1220
    %1297 = vmatprep.subr.mxu0 0.0
    %1298 = vmatpush1.msra.mxu0 %v1221
    %1299 = vmatprep.subr.mxu0 0.0
    %1300 = vmatpush1.msra.mxu0 0.0
    %1301 = vmatprep.subr.mxu0 0.0
    %1302 = vmatpush1.msra.mxu0 0.0
    %1303 = vmatprep.subr.mxu0 0.0
    %1304 = vmatpush1.msra.mxu0 0.0
    %1305 = vmatprep.subr.mxu0 0.0
    %1306 = vmatpush1.msra.mxu0 0.0
    %1307 = vmatprep.subr.mxu0 0.0
    %1308 = vmatpush1.msra.mxu0 0.0
    %1309 = vmatprep.subr.mxu0 0.0
    %1310 = vmatpush1.msra.mxu0 0.0
    %1311 = vmatprep.subr.mxu0 0.0
    %1312 = vmatpush1.msra.mxu0 0.0
    %1313 = vmatprep.subr.mxu0 0.0
    %1314 = vmatpush1.msra.mxu0 0.0
    %1315 = vmatprep.subr.mxu0 0.0
    %1316 = vmatpush1.msra.mxu0 0.0
    %1317 = vmatprep.subr.mxu0 0.0
    %1318 = vmatpush1.msra.mxu0 0.0
    %1319 = vmatprep.subr.mxu0 0.0
    %1320 = vmatpush1.msra.mxu0 0.0
    %1321 = vmatprep.subr.mxu0 0.0
    %1322 = vmatpush1.msra.mxu0 0.0
    %1323 = vmatprep.subr.mxu0 0.0
    %1324 = vmatpush1.msra.mxu0 0.0
    %1325 = vmatprep.subr.mxu0 0.0
    %1326 = vmatpush1.msra.mxu0 0.0
    %1327 = vmatprep.subr.mxu0 0.0
    %1328 = vmatpush1.msra.mxu0 0.0
    %1329 = vmatprep.subr.mxu0 0.0
    %1330 = vmatpush1.msra.mxu0 0.0
    %1331 = vmatprep.subr.mxu0 0.0
    %1332 = vmatpush1.msra.mxu0 0.0
    %1333 = vmatprep.subr.mxu0 0.0
    %1334 = vmatpush1.msra.mxu0 0.0
    %1335 = vmatprep.subr.mxu0 0.0
    %1336 = vmatpush1.msra.mxu0 0.0
    %1337 = vmatprep.subr.mxu0 0.0
    %1338 = vmatpush1.msra.mxu0 0.0
    %1339 = vmatprep.subr.mxu0 0.0
    %1340 = vmatpush1.msra.mxu0 0.0
    %1341 = vmatprep.mubr.f32.mxu0 0.0
    %1342 = vmatmul.mubr.f32.gmra.mrb[0].mxu0 %v1224
    %v1343 = vpop.f32.mrb[0].mxu0
    %v1344 = vadd.f32 0.0, %v1343
    %v1345 = vpop.f32.mrb[0].mxu0
    %1346 = vmatprep.mubr.f32.mxu0 0.0
    %1347 = vmatmul.mubr.f32.gmra.mrb[0].mxu0 %v1227
    %v1348 = vpop.f32.mrb[0].mxu0
    %v1349 = vadd.f32 0.0, %v1348
    %v1350 = vpop.f32.mrb[0].mxu0
    %1351 = vmatprep.mubr.f32.mxu0 0.0
    %1352 = vmatmul.mubr.f32.gmra.mrb[0].mxu0 %v1230
    %v1353 = vpop.f32.mrb[0].mxu0
    %v1354 = vadd.f32 0.0, %v1353
    %v1355 = vpop.f32.mrb[0].mxu0
    %1356 = vmatprep.mubr.f32.mxu0 0.0
    %1357 = vmatmul.mubr.f32.gmra.mrb[0].mxu0 %v1233
    %v1358 = vpop.f32.mrb[0].mxu0
    %v1359 = vadd.f32 0.0, %v1358
    %v1360 = vpop.f32.mrb[0].mxu0
    %1361 = vmatprep.mubr.f32.mxu0 0.0
    %1362 = vmatmul.mubr.f32.gmra.mrb[0].mxu0 %v1236
    %v1363 = vpop.f32.mrb[0].mxu0
    %v1364 = vadd.f32 0.0, %v1363
    %v1365 = vpop.f32.mrb[0].mxu0
    %1366 = vmatprep.mubr.f32.mxu0 0.0
    %1367 = vmatmul.mubr.f32.gmra.mrb[0].mxu0 %v1239
    %v1368 = vpop.f32.mrb[0].mxu0
    %v1369 = vadd.f32 0.0, %v1368
    %v1370 = vpop.f32.mrb[0].mxu0
    %1371 = vmatprep.mubr.f32.mxu0 0.0
    %1372 = vmatmul.mubr.f32.gmra.mrb[0].mxu0 %v1242
    %v1373 = vpop.f32.mrb[0].mxu0
    %v1374 = vadd.f32 0.0, %v1373
    %v1375 = vpop.f32.mrb[0].mxu0
    %1376 = vmatprep.mubr.f32.mxu0 0.0
    %1377 = vmatmul.mubr.f32.gmra.mrb[0].mxu0 %v1245
    %v1378 = vpop.f32.mrb[0].mxu0
    %v1379 = vadd.f32 0.0, %v1378
    %v1380 = vpop.f32.mrb[0].mxu0
    %1381 = vmatprep.mubr.f32.mxu0 0.0
    %1382 = vmatmul.mubr.f32.gmra.mrb[0].mxu0 %v1248
    %v1383 = vpop.f32.mrb[0].mxu0
    %v1384 = vadd.f32 0.0, %v1383
    %v1385 = vpop.f32.mrb[0].mxu0
    %1386 = vmatprep.mubr.f32.mxu0 0.0
    %1387 = vmatmul.mubr.f32.gmra.mrb[0].mxu0 %v1251
    %v1388 = vpop.f32.mrb[0].mxu0
    %v1389 = vadd.f32 0.0, %v1388
    %v1390 = vpop.f32.mrb[0].mxu0
    %1391 = vmatprep.mubr.f32.mxu0 0.0
    %1392 = vmatmul.mubr.f32.gmra.mrb[0].mxu0 %v1254
    %v1393 = vpop.f32.mrb[0].mxu0
    %v1394 = vadd.f32 0.0, %v1393
    %v1395 = vpop.f32.mrb[0].mxu0
    %1396 = vmatprep.mubr.f32.mxu0 0.0
    %1397 = vmatmul.mubr.f32.gmra.mrb[0].mxu0 %v1257
    %v1398 = vpop.f32.mrb[0].mxu0
    %v1399 = vadd.f32 0.0, %v1398
    %v1400 = vpop.f32.mrb[0].mxu0
    %1401 = vmatprep.mubr.f32.mxu0 0.0
    %1402 = vmatmul.mubr.f32.gmra.mrb[0].mxu0 %v1260
    %v1403 = vpop.f32.mrb[0].mxu0
    %v1404 = vadd.f32 0.0, %v1403
    %v1405 = vpop.f32.mrb[0].mxu0
    %1406 = vmatprep.mubr.f32.mxu0 0.0
    %1407 = vmatmul.mubr.f32.gmra.mrb[0].mxu0 %v1263
    %v1408 = vpop.f32.mrb[0].mxu0
    %v1409 = vadd.f32 0.0, %v1408
    %v1410 = vpop.f32.mrb[0].mxu0
    %1411 = vmatprep.mubr.f32.mxu0 0.0
    %1412 = vmatmul.mubr.f32.gmra.mrb[0].mxu0 %v1266
    %v1413 = vpop.f32.mrb[0].mxu0
    %v1414 = vadd.f32 0.0, %v1413
    %v1415 = vpop.f32.mrb[0].mxu0
    %1416 = vmatprep.mubr.f32.mxu0 0.0
    %1417 = vmatmul.mubr.f32.gmra.mrb[0].mxu0 %v1269
    %v1418 = vpop.f32.mrb[0].mxu0
    %v1419 = vadd.f32 0.0, %v1418
    %v1420 = vpop.f32.mrb[0].mxu0
    %1421 = vmatprep.mubr.f32.mxu0 0.0
    %1422 = vmatmul.mubr.f32.gmra.mrb[0].mxu0 %v1272
    %v1423 = vpop.f32.mrb[0].mxu0
    %v1424 = vadd.f32 0.0, %v1423
    %v1425 = vpop.f32.mrb[0].mxu0
    %1426 = vmatprep.mubr.f32.mxu0 0.0
    %1427 = vmatmul.mubr.f32.gmra.mrb[0].mxu0 %v1275
    %v1428 = vpop.f32.mrb[0].mxu0
    %v1429 = vadd.f32 0.0, %v1428
    %v1430 = vpop.f32.mrb[0].mxu0
    %1431 = vdwg.mxu0
    %v1432 = vmul.f32 %v1344, 0.5
    %v1433 = vmul.f32 %v1349, 0.5
    %v1434 = vmul.f32 %v1354, 0.5
    %v1435 = vmul.f32 %v1359, 0.5
    %v1436 = vmul.f32 %v1364, 0.5
    %v1437 = vmul.f32 %v1369, 0.5
    %v1438 = vmul.f32 %v1374, 0.5
    %v1439 = vmul.f32 %v1379, 0.5
    %v1440 = vmul.f32 %v1384, 0.5
    %v1441 = vmul.f32 %v1389, 0.5
    %v1442 = vmul.f32 %v1394, 0.5
    %v1443 = vmul.f32 %v1399, 0.5
    %v1444 = vmul.f32 %v1404, 0.5
    %v1445 = vmul.f32 %v1409, 0.5
    %v1446 = vmul.f32 %v1414, 0.5
    %v1447 = vmul.f32 %v1419, 0.5
    %v1448 = vmul.f32 %v1424, 0.5
    %v1449 = vmul.f32 %v1429, 0.5
    %v1450 = vmul.f32 %v1344, 0.70710677
    %v1451 = vmul.f32 %v1349, 0.70710677
    %v1452 = vmul.f32 %v1354, 0.70710677
    %v1453 = vmul.f32 %v1359, 0.70710677
    %v1454 = vmul.f32 %v1364, 0.70710677
    %v1455 = vmul.f32 %v1369, 0.70710677
    %v1456 = vmul.f32 %v1374, 0.70710677
    %v1457 = vmul.f32 %v1379, 0.70710677
    %v1458 = vmul.f32 %v1384, 0.70710677
    %v1459 = vmul.f32 %v1389, 0.70710677
    %v1460 = vmul.f32 %v1394, 0.70710677
    %v1461 = vmul.f32 %v1399, 0.70710677
    %v1462 = vmul.f32 %v1404, 0.70710677
    %v1463 = vmul.f32 %v1409, 0.70710677
    %v1464 = vmul.f32 %v1414, 0.70710677
    %v1465 = vmul.f32 %v1419, 0.70710677
    %v1466 = vmul.f32 %v1424, 0.70710677
    %v1467 = vmul.f32 %v1429, 0.70710677
    %v1468 = verf.f32.pop %v1450
    %v1469 = verf.f32.pop %v1451
    %v1470 = verf.f32.pop %v1452
    %v1471 = verf.f32.pop %v1453
    %v1472 = verf.f32.pop %v1454
    %v1473 = verf.f32.pop %v1455
    %v1474 = verf.f32.pop %v1456
    %v1475 = verf.f32.pop %v1457
    %v1476 = verf.f32.pop %v1458
    %v1477 = verf.f32.pop %v1459
    %v1478 = verf.f32.pop %v1460
    %v1479 = verf.f32.pop %v1461
    %v1480 = verf.f32.pop %v1462
    %v1481 = verf.f32.pop %v1463
    %v1482 = verf.f32.pop %v1464
    %v1483 = verf.f32.pop %v1465
    %v1484 = verf.f32.pop %v1466
    %v1485 = verf.f32.pop %v1467
    %v1486 = vadd.f32 %v1468, 1.0
    %v1487 = vadd.f32 %v1469, 1.0
    %v1488 = vadd.f32 %v1470, 1.0
    %v1489 = vadd.f32 %v1471, 1.0
    %v1490 = vadd.f32 %v1472, 1.0
    %v1491 = vadd.f32 %v1473, 1.0
    %v1492 = vadd.f32 %v1474, 1.0
    %v1493 = vadd.f32 %v1475, 1.0
    %v1494 = vadd.f32 %v1476, 1.0
    %v1495 = vadd.f32 %v1477, 1.0
    %v1496 = vadd.f32 %v1478, 1.0
    %v1497 = vadd.f32 %v1479, 1.0
    %v1498 = vadd.f32 %v1480, 1.0
    %v1499 = vadd.f32 %v1481, 1.0
    %v1500 = vadd.f32 %v1482, 1.0
    %v1501 = vadd.f32 %v1483, 1.0
    %v1502 = vadd.f32 %v1484, 1.0
    %v1503 = vadd.f32 %v1485, 1.0
    %v1504 = vmul.f32 %v1432, %v1486
    %v1505 = vmul.f32 %v1433, %v1487
    %v1506 = vmul.f32 %v1434, %v1488
    %v1507 = vmul.f32 %v1435, %v1489
    %v1508 = vmul.f32 %v1436, %v1490
    %v1509 = vmul.f32 %v1437, %v1491
    %v1510 = vmul.f32 %v1438, %v1492
    %v1511 = vmul.f32 %v1439, %v1493
    %v1512 = vmul.f32 %v1440, %v1494
    %v1513 = vmul.f32 %v1441, %v1495
    %v1514 = vmul.f32 %v1442, %v1496
    %v1515 = vmul.f32 %v1443, %v1497
    %v1516 = vmul.f32 %v1444, %v1498
    %v1517 = vmul.f32 %v1445, %v1499
    %v1518 = vmul.f32 %v1446, %v1500
    %v1519 = vmul.f32 %v1447, %v1501
    %v1520 = vmul.f32 %v1448, %v1502
    %v1521 = vmul.f32 %v1449, %v1503
    %v1522 = vld [vmem:[%s3] sm:$0x77]
    %v1523 = vld [vmem:[%s4] sm:$0x7]
    %1525 = vset.pattern.permute.xlu0 0
    %1526 = vperm.xlu0 %1525, %v1523
    %v1527 = vpop.permute.xlu0 %1526
    %v1530 = vcombine.high %v1522, %v1522
    %vm1531 = vcmask 130048
    %v1532 = vsel %vm1531, %v1530, 0
    %1534 = vmatprep.subr.mxu0 0.0
    %1535 = vmatpush1.msra.mxu0 %v1504
    %1536 = vmatprep.subr.mxu0 0.0
    %1537 = vmatpush1.msra.mxu0 %v1505
    %1538 = vmatprep.subr.mxu0 0.0
    %1539 = vmatpush1.msra.mxu0 %v1506
    %1540 = vmatprep.subr.mxu0 0.0
    %1541 = vmatpush1.msra.mxu0 %v1507
    %1542 = vmatprep.subr.mxu0 0.0
    %1543 = vmatpush1.msra.mxu0 %v1508
    %1544 = vmatprep.subr.mxu0 0.0
    %1545 = vmatpush1.msra.mxu0 %v1509
    %1546 = vmatprep.subr.mxu0 0.0
    %1547 = vmatpush1.msra.mxu0 %v1510
    %1548 = vmatprep.subr.mxu0 0.0
    %1549 = vmatpush1.msra.mxu0 %v1511
    %1550 = vmatprep.subr.mxu0 0.0
    %1551 = vmatpush1.msra.mxu0 %v1512
    %1552 = vmatprep.subr.mxu0 0.0
    %1553 = vmatpush1.msra.mxu0 %v1513
    %1554 = vmatprep.subr.mxu0 0.0
    %1555 = vmatpush1.msra.mxu0 %v1514
    %1556 = vmatprep.subr.mxu0 0.0
    %1557 = vmatpush1.msra.mxu0 %v1515
    %1558 = vmatprep.subr.mxu0 0.0
    %1559 = vmatpush1.msra.mxu0 %v1516
    %1560 = vmatprep.subr.mxu0 0.0
    %1561 = vmatpush1.msra.mxu0 %v1517
    %1562 = vmatprep.subr.mxu0 0.0
    %1563 = vmatpush1.msra.mxu0 %v1518
    %1564 = vmatprep.subr.mxu0 0.0
    %1565 = vmatpush1.msra.mxu0 %v1519
    %1566 = vmatprep.subr.mxu0 0.0
    %1567 = vmatpush1.msra.mxu0 %v1520
    %1568 = vmatprep.subr.mxu0 0.0
    %1569 = vmatpush1.msra.mxu0 %v1521
    %1570 = vmatprep.subr.mxu0 0.0
    %1571 = vmatpush1.msra.mxu0 0.0
    %1572 = vmatprep.subr.mxu0 0.0
    %1573 = vmatpush1.msra.mxu0 0.0
    %1574 = vmatprep.subr.mxu0 0.0
    %1575 = vmatpush1.msra.mxu0 0.0
    %1576 = vmatprep.subr.mxu0 0.0
    %1577 = vmatpush1.msra.mxu0 0.0
    %1578 = vmatprep.subr.mxu0 0.0
    %1579 = vmatpush1.msra.mxu0 0.0
    %1580 = vmatprep.subr.mxu0 0.0
    %1581 = vmatpush1.msra.mxu0 0.0
    %1582 = vmatprep.subr.mxu0 0.0
    %1583 = vmatpush1.msra.mxu0 0.0
    %1584 = vmatprep.subr.mxu0 0.0
    %1585 = vmatpush1.msra.mxu0 0.0
    %1586 = vmatprep.subr.mxu0 0.0
    %1587 = vmatpush1.msra.mxu0 0.0
    %1588 = vmatprep.subr.mxu0 0.0
    %1589 = vmatpush1.msra.mxu0 0.0
    %1590 = vmatprep.subr.mxu0 0.0
    %1591 = vmatpush1.msra.mxu0 0.0
    %1592 = vmatprep.subr.mxu0 0.0
    %1593 = vmatpush1.msra.mxu0 0.0
    %1594 = vmatprep.subr.mxu0 0.0
    %1595 = vmatpush1.msra.mxu0 0.0
    %1596 = vmatprep.subr.mxu0 0.0
    %1597 = vmatpush1.msra.mxu0 0.0
    %1598 = vmatprep.mubr.f32.mxu0 %v1532
    %1599 = vmatmul.mubr.f32.gmra.mrb[0].mxu0 %v1522
    %v1600 = vpop.f32.mrb[0].mxu0
    %v1601 = vadd.f32 %v1527, %v1600
    %v1602 = vpop.f32.mrb[0].mxu0
    %1603 = vdwg.mxu0
    %v1604 = vmul.f32 %v35, %v1601
    %v1605 = vadd.f32 %v35, %v1604
    %1606 = vst [vmem:[#allocation6] sm:$0x7] %v1605
    // Predicated region
    $region26: #{tpu_custom_call.1} parent=1 // pred_check
      _
    $region27: #{tpu_custom_call.1} parent=1 // pred_check_branch
      %1608 = sbr.rel (0) target = $region29
    $region28: #{tpu_custom_call.1} parent=1 // pred_region
      %s1610 = ssub.s32 64, 64
      %1611 = vsyncadd [#allocation5], %s1610
      %s1613 = sshll.u32 [#allocation6], 4
      %s1614 = int_to_ptr.vmem [resolvable:$true] %s1613
      %1616 = dma.vmem_to_hbm [thread:$0]  %s1614, 64, %s5, [#allocation5]
    $region29: #{tpu_custom_call.1} parent=1 // pred_fallthru
      _
    // Predicated region
    $region30: #{tpu_custom_call.1} parent=1 // pred_check
      _
    $region31: #{tpu_custom_call.1} parent=1 // pred_check_branch
      %1618 = sbr.rel (0) target = $region33
    $region32: #{tpu_custom_call.1} parent=1 // pred_region
      %1619 = dma.done [#allocation5], 64
    $region33: #{tpu_custom_call.1} parent=1 // pred_fallthru
      _
    %1620 = vsyncpa [#allocation4], 1
    %1621 = vsyncpa [#allocation5], 1

</llo_original>
